<compile_context>
chip_gen: v5e
topology: v5e:2x2
jax: 0.10.0
libtpu: 0.0.40
codegen_flags: <defaults>
</compile_context>

<pallas_src>
import jax
import jax.numpy as jnp
from jax.experimental import pallas as pl
from jax.experimental.pallas import tpu as pltpu


def _predictor_kernel(q_ref, m_ref, wq_ref, wm_ref, b_ref, o_ref):
    # q_ref / m_ref: (tile, R*D)  -- tile super-rows, each packing R batch rows (lane-dense).
    # wq_ref / wm_ref: (R*D, R)   -- block-diagonal folded Linear weights (f32, resident).
    # b_ref: (8, R) bias broadcast slab (f32, resident).
    # o_ref: (tile, R) f32        -- lane-dense sigmoid outputs.
    q = q_ref[...].astype(jnp.float32)
    m = m_ref[...].astype(jnp.float32)
    logits = (jnp.dot(q, wq_ref[...], preferred_element_type=jnp.float32)
              + jnp.dot(m, wm_ref[...], preferred_element_type=jnp.float32)
              + b_ref[0:1, :])
    o_ref[...] = jax.nn.sigmoid(logits).astype(o_ref.dtype)


def _round_up(x, m):
    return ((x + m - 1) // m) * m


def _vmem_capacity_bytes():
    try:
        return int(pltpu.get_tpu_info().vmem_capacity_bytes)
    except Exception:
        return 64 << 20        # conservative: v7x has 64 MiB per TensorCore


def _vmem_estimate(tile, R, D, in_itemsize):
    """VMEM bytes, accounting for sublane (8) / lane (128) padding of every block."""
    lane = lambda n: _round_up(n, 128)
    sub = lambda n: _round_up(n, 8)
    q_m = 2 * 2 * sub(tile) * lane(R * D) * in_itemsize   # 2 streamed inputs x 2 pipeline bufs
    wts = 2 * 2 * sub(R * D) * lane(R) * 4                # 2 resident weights (count 2 bufs)
    bias = 2 * sub(8) * lane(R) * 4
    out = 2 * sub(tile) * lane(R) * 4                     # lane-dense output, 2 bufs
    return q_m + wts + bias + out


def _choose_superrow_tile(S, bytes_per_superrow, target_bytes):
    """Tile size in super-rows (always a multiple of 8).

    Targets ~target_bytes of streamed q+m per grid step; keeps >=2 grid steps (>=4 for
    large batches) so v7x's two TensorCores both get work; never falls back to tiny
    tiles for awkward batch sizes (the wrapper pads instead).
    """
    r8 = lambda x: max(8, _round_up(max(1, x), 8))
    total = S * bytes_per_superrow
    if total <= 2 * target_bytes:
        # Small problem: split once only when the stream is big enough (>2 MiB) that the
        # parallel DMA win beats the extra ~0.35 us per-step overhead.
        steps = 1 if total <= (2 << 20) else 2
    else:
        steps = max(4, -(-total // target_bytes))
    return r8(-(-S // steps))


def performance_predictor(q, m, weight, bias, *, superrow_tile=None,
                          target_step_bytes=4 << 20, cast_to_bfloat16=False):
    """q, m: (B, D) float32/bfloat16; weight: (1, 2*D) (PyTorch Linear layout); bias: (1,)."""
    B, D = q.shape
    assert m.shape == (B, D)
    assert weight.shape == (1, 2 * D)
    assert bias.shape == (1,)

    if cast_to_bfloat16:
        q = q.astype(jnp.bfloat16)
        m = m.astype(jnp.bfloat16)

    # Packing width R: R batch rows per lane-dense super-row of R*D features.  The folded
    # block-diagonal weight is (R*D, R) f32; keep it <= ~2 MiB per input (R=128 for D<=32).
    R = 128
    while R > 8 and (R * D) * R * 4 > (2 << 20):
        R //= 2

    itemsize = jnp.dtype(q.dtype).itemsize
    bytes_per_superrow = 2 * R * D * itemsize          # q + m streamed per super-row
    S = pl.cdiv(B, R)                                  # super-rows before padding

    if superrow_tile is None:
        tile = _choose_superrow_tile(S, bytes_per_superrow, target_step_bytes)
    else:
        tile = max(8, _round_up(int(superrow_tile), 8))

    # Fit the (padded) footprint into VMEM with headroom (v7x: 64 MiB physical per TC).
    cap = _vmem_capacity_bytes()
    budget = int(0.70 * cap)
    est = _vmem_estimate(tile, R, D, itemsize)
    while est > budget and tile > 8:
        tile = max(8, _round_up(tile // 2, 8))
        est = _vmem_estimate(tile, R, D, itemsize)

    S_pad = pl.cdiv(S, tile) * tile
    B_pad = S_pad * R
    grid = (S_pad // tile,)

    # Pad the batch (zeros -> harmless sigmoid(bias) rows, sliced off below), then a FREE
    # row-major reshape to the lane-dense packed layout.
    if B_pad != B:
        q = jnp.pad(q, ((0, B_pad - B), (0, 0)))
        m = jnp.pad(m, ((0, B_pad - B), (0, 0)))
    qp = q.reshape(S_pad, R * D)
    mp = m.reshape(S_pad, R * D)

    # Fold the Linear weights into block-diagonal (R*D, R) matrices:
    #   Wblk[r*D + d, r] = w[d]   ->   (packed_row @ Wblk)[r] = <q[row r], w>.
    w = weight.astype(jnp.float32)
    eye = jnp.eye(R, dtype=jnp.float32)
    wq_big = jnp.kron(eye, w[0, :D].reshape(D, 1))     # (R*D, R)
    wm_big = jnp.kron(eye, w[0, D:].reshape(D, 1))     # (R*D, R)
    b_slab = jnp.full((8, R), bias.astype(jnp.float32)[0], dtype=jnp.float32)

    compiler_kwargs = dict(dimension_semantics=("parallel",))
    if est > (12 << 20):   # beyond the smallest (v5e) scoped-VMEM default
        limit = int(min(cap - (4 << 20), max(est + (4 << 20), 16 << 20)))
        compiler_kwargs["vmem_limit_bytes"] = limit

    out = pl.pallas_call(
        _predictor_kernel,
        out_shape=jax.ShapeDtypeStruct((S_pad, R), jnp.float32),
        grid_spec=pltpu.PrefetchScalarGridSpec(
            num_scalar_prefetch=0,
            grid=grid,
            in_specs=[
                pl.BlockSpec((tile, R * D), lambda i: (i, 0)),   # q super-rows (streamed)
                pl.BlockSpec((tile, R * D), lambda i: (i, 0)),   # m super-rows (streamed)
                pl.BlockSpec((R * D, R), lambda i: (0, 0)),      # W_q block-diag (resident)
                pl.BlockSpec((R * D, R), lambda i: (0, 0)),      # W_m block-diag (resident)
                pl.BlockSpec((8, R), lambda i: (0, 0)),          # bias slab (resident)
            ],
            out_specs=pl.BlockSpec((tile, R), lambda i: (i, 0)), # lane-dense output
        ),
        compiler_params=pltpu.CompilerParams(**compiler_kwargs),
    )(qp, mp, wq_big, wm_big, b_slab)

    # Free row-major reshape back to (B, 1); drop padded rows.
    return out.reshape(B_pad, 1)[:B]


def performance_predictor_ref(q, m, weight, bias):
    p = jnp.concatenate([q.astype(jnp.float32), m.astype(jnp.float32)], axis=1)
    return jax.nn.sigmoid(p @ weight.astype(jnp.float32).T + bias.astype(jnp.float32))


if __name__ == "__main__":
    # Shapes consistent with the module: args.n_dims = 32.
    D = 32
    key = jax.random.PRNGKey(0)
    kq, km, kw, kb = jax.random.split(key, 4)

    bound = 1.0 / (2 * D) ** 0.5
    weight = jax.random.uniform(kw, (1, 2 * D), jnp.float32, -bound, bound)
    bias = jax.random.uniform(kb, (1,), jnp.float32, -bound, bound)

    # Tolerance note: the matmul runs on the MXU; even if the compiler uses a single
    # bf16 pass for the f32 contraction the logit error stays ~1e-3, so 5e-3 on the
    # sigmoid output is a safe-but-meaningful bound (typically agrees to ~1e-6).
    TOL = 5e-3

    # Case 1: tiny f32 batch (exercises zero-padding up to one super-row tile).
    B = 8
    q = jax.random.normal(kq, (B, D), dtype=jnp.float32)
    m = jax.random.normal(km, (B, D), dtype=jnp.float32)
    out = jax.block_until_ready(performance_predictor(q, m, weight, bias))
    ref = performance_predictor_ref(q, m, weight, bias)
    assert out.shape == (B, 1)
    assert jnp.allclose(out, ref, atol=TOL, rtol=0), (out, ref)

    # Case 2: bf16 inputs + forced multi-step grid (exercises streaming/pipelining path).
    B2 = 2048
    q2 = jax.random.normal(kq, (B2, D), dtype=jnp.float32).astype(jnp.bfloat16)
    m2 = jax.random.normal(km, (B2, D), dtype=jnp.float32).astype(jnp.bfloat16)
    out2 = jax.block_until_ready(
        performance_predictor(q2, m2, weight, bias, superrow_tile=8))
    ref2 = performance_predictor_ref(q2, m2, weight, bias)
    assert out2.shape == (B2, 1)
    assert jnp.allclose(out2, ref2, atol=TOL, rtol=0), (out2, ref2)

    print("KERNEL_OK")
</pallas_src>

<mosaic_0001>
module attributes {stable_mosaic.version = 11 : i64} {
  func.func @_predictor_kernel(%arg0: i32, %arg1: memref<8x4096xf32, #tpu.memory_space<vmem>>, %arg2: memref<8x4096xf32, #tpu.memory_space<vmem>>, %arg3: memref<4096x128xf32, #tpu.memory_space<vmem>>, %arg4: memref<4096x128xf32, #tpu.memory_space<vmem>>, %arg5: memref<8x128xf32, #tpu.memory_space<vmem>>, %arg6: memref<8x128xf32, #tpu.memory_space<vmem>>) attributes {dimension_semantics = [#tpu.dimension_semantics<parallel>], iteration_bounds = array<i64: 1>, scalar_prefetch = 0 : i64, scratch_operands = 0 : i64, tpu.core_type = #tpu.core_type<tc>, window_params = [{transform_indices = @transform_0, window_bounds = array<i64: 8, 4096>}, {transform_indices = @transform_1, window_bounds = array<i64: 8, 4096>}, {pipeline_mode = #tpu.pipeline_mode<synchronous>, transform_indices = @transform_2, window_bounds = array<i64: 4096, 128>}, {pipeline_mode = #tpu.pipeline_mode<synchronous>, transform_indices = @transform_3, window_bounds = array<i64: 4096, 128>}, {pipeline_mode = #tpu.pipeline_mode<synchronous>, transform_indices = @transform_4, window_bounds = array<i64: 8, 128>}, {transform_indices = @transform_5, window_bounds = array<i64: 8, 128>}]} {
    %c0 = arith.constant 0 : index
    %c0_0 = arith.constant 0 : index
    %0 = vector.load %arg1[%c0, %c0_0] : memref<8x4096xf32, #tpu.memory_space<vmem>>, vector<8x4096xf32>
    %c0_1 = arith.constant 0 : index
    %c0_2 = arith.constant 0 : index
    %1 = vector.load %arg2[%c0_1, %c0_2] : memref<8x4096xf32, #tpu.memory_space<vmem>>, vector<8x4096xf32>
    %c0_3 = arith.constant 0 : index
    %c0_4 = arith.constant 0 : index
    %2 = vector.load %arg3[%c0_3, %c0_4] : memref<4096x128xf32, #tpu.memory_space<vmem>>, vector<4096x128xf32>
    %cst = arith.constant dense<0.000000e+00> : vector<8x128xf32>
    %3 = tpu.matmul %0, %2, %cst {dimension_numbers = #tpu.dot_dimension_numbers<[1], [0], [0], [1], [0, 0, 1, 1], [], []>} : vector<8x4096xf32>, vector<4096x128xf32>, vector<8x128xf32> -> vector<8x128xf32>
    %c0_5 = arith.constant 0 : index
    %c0_6 = arith.constant 0 : index
    %4 = vector.load %arg4[%c0_5, %c0_6] : memref<4096x128xf32, #tpu.memory_space<vmem>>, vector<4096x128xf32>
    %cst_7 = arith.constant dense<0.000000e+00> : vector<8x128xf32>
    %5 = tpu.matmul %1, %4, %cst_7 {dimension_numbers = #tpu.dot_dimension_numbers<[1], [0], [0], [1], [0, 0, 1, 1], [], []>} : vector<8x4096xf32>, vector<4096x128xf32>, vector<8x128xf32> -> vector<8x128xf32>
    %6 = arith.addf %3, %5 : vector<8x128xf32>
    %c0_8 = arith.constant 0 : index
    %c0_9 = arith.constant 0 : index
    %7 = vector.load %arg5[%c0_8, %c0_9] : memref<8x128xf32, #tpu.memory_space<vmem>>, vector<1x128xf32>
    %8 = vector.broadcast %7 : vector<1x128xf32> to vector<8x128xf32>
    %9 = arith.addf %6, %8 : vector<8x128xf32>
    %10 = arith.negf %9 : vector<8x128xf32>
    %11 = math.exp %10 : vector<8x128xf32>
    %cst_10 = arith.constant 1.000000e+00 : f32
    %12 = vector.broadcast %cst_10 : f32 to vector<8x128xf32>
    %13 = arith.addf %12, %11 : vector<8x128xf32>
    %14 = arith.divf %12, %13 : vector<8x128xf32>
    %c0_11 = arith.constant 0 : index
    %c0_12 = arith.constant 0 : index
    %15 = vector.load %arg6[%c0_11, %c0_12] : memref<8x128xf32, #tpu.memory_space<vmem>>, vector<8x128xf32>
    tpu.vector_store %arg6[%c0_11, %c0_12], %14 {strides = array<i32>} : memref<8x128xf32, #tpu.memory_space<vmem>>, vector<8x128xf32>,
    return
  }
  func.func @transform_0(%arg0: i32) -> (i32, i32) {
    %c0_i32 = arith.constant 0 : i32
    %c0_i32_0 = arith.constant 0 : i32
    return %arg0, %c0_i32 : i32, i32
  }
  func.func @transform_1(%arg0: i32) -> (i32, i32) {
    %c0_i32 = arith.constant 0 : i32
    %c0_i32_0 = arith.constant 0 : i32
    return %arg0, %c0_i32 : i32, i32
  }
  func.func @transform_2(%arg0: i32) -> (i32, i32) {
    %c0_i32 = arith.constant 0 : i32
    %c0_i32_0 = arith.constant 0 : i32
    %c0_i32_1 = arith.constant 0 : i32
    return %c0_i32, %c0_i32_0 : i32, i32
  }
  func.func @transform_3(%arg0: i32) -> (i32, i32) {
    %c0_i32 = arith.constant 0 : i32
    %c0_i32_0 = arith.constant 0 : i32
    %c0_i32_1 = arith.constant 0 : i32
    return %c0_i32, %c0_i32_0 : i32, i32
  }
  func.func @transform_4(%arg0: i32) -> (i32, i32) {
    %c0_i32 = arith.constant 0 : i32
    %c0_i32_0 = arith.constant 0 : i32
    %c0_i32_1 = arith.constant 0 : i32
    return %c0_i32, %c0_i32_0 : i32, i32
  }
  func.func @transform_5(%arg0: i32) -> (i32, i32) {
    %c0_i32 = arith.constant 0 : i32
    %c0_i32_0 = arith.constant 0 : i32
    return %arg0, %c0_i32 : i32, i32
  }
}

</mosaic_0001>

<llo_original>
// kernel: tpu_custom_call.1
$region0: #{tpu_custom_call.1}
  #allocation0 [shape = 'u32[]', space=smem, size = 0x4, offset = 0x4, fixed_abs, tag = 'smem constant byte address 0x4 - core index']
  #allocation1 [shape = 'u32[72,128]{1,0:T(1,128)}', space=vmem, size = 0x9000, scoped, tag = 'internal scratch']
  %s0 = inlined_call_operand.hbm [shape: f32[8,4096], index: 0, kind: input, shape index: {}]
  %s1 = inlined_call_operand.hbm [shape: f32[8,4096], index: 1, kind: input, shape index: {}]
  %s2 = inlined_call_operand.hbm [shape: f32[4096,128], index: 2, kind: input, shape index: {}]
  %s3 = inlined_call_operand.hbm [shape: f32[4096,128], index: 3, kind: input, shape index: {}]
  %s4 = inlined_call_operand.hbm [shape: f32[8,128], index: 4, kind: input, shape index: {}]
  %s5 = inlined_call_operand.hbm [shape: f32[8,128], index: 5, kind: output, shape index: {}]
  %s6 = sld [smem:[#allocation0]]
  $region50: #{tpu_custom_call.1} parent=0
    _
  %s8 = ssub.s32 1, %s6
  %s9 = scalar_select 0, %s8, %s6
  $region1: #{tpu_custom_call.1} parent=0
    #allocation2 [shape = 'u8[131072]{0}', space=vmem, size = 0x20000, scoped, tag = 'input window, operand 0, single buffered']
    #allocation3 [shape = 's32[1]{0}', space=sflag, size = 0x4, scoped, tag = 'scoped memory for tpu_custom_call.1']
    #allocation4 [shape = 's32[1]{0}', space=sflag, size = 0x4, scoped, tag = 'scoped memory for tpu_custom_call.1']
    #allocation5 [shape = 'u8[131072]{0}', space=vmem, size = 0x20000, scoped, tag = 'input window, operand 1, single buffered']
    #allocation6 [shape = 's32[1]{0}', space=sflag, size = 0x4, scoped, tag = 'scoped memory for tpu_custom_call.1']
    #allocation7 [shape = 'u8[2097152]{0}', space=vmem, size = 0x200000, scoped, tag = 'input window, operand 2, single buffered']
    #allocation8 [shape = 'u8[2097152]{0}', space=vmem, size = 0x200000, scoped, tag = 'input window, operand 3, single buffered']
    #allocation9 [shape = 's32[1]{0}', space=sflag, size = 0x4, scoped, tag = 'scoped memory for tpu_custom_call.1']
    #allocation10 [shape = 'u8[4096]{0}', space=vmem, size = 0x1000, scoped, tag = 'input window, operand 4, single buffered']
    #allocation11 [shape = 'u8[4096]{0}', space=vmem, size = 0x1000, scoped, tag = 'output window, operand 0, single buffered']
    %10 = vsyncpa [#allocation3], 0
    %11 = vsyncpa [#allocation6], 0
    %12 = vsyncpa [#allocation9], 0
    %13 = vsyncpa [#allocation4], 0
    // Predicated region
    $region2: #{tpu_custom_call.1} parent=1 // pred_check
      _
    $region3: #{tpu_custom_call.1} parent=1 // pred_check_branch
      %15 = sbr.rel (0) target = $region5
    $region4: #{tpu_custom_call.1} parent=1 // pred_region
      %17 = vsyncadd [#allocation3], 0
      %s19 = sshll.u32 %s0, 4
      %s20 = int_to_ptr.hbm [resolvable:$true] %s19
      %s21 = sshll.u32 [#allocation2], 4
      %s22 = int_to_ptr.vmem [resolvable:$true] %s21
      %24 = dma.hbm_to_vmem [thread:$0]  %s20, 4096, %s22, [#allocation3]
    $region5: #{tpu_custom_call.1} parent=1 // pred_fallthru
      _
    // Predicated region
    $region6: #{tpu_custom_call.1} parent=1 // pred_check
      _
    $region7: #{tpu_custom_call.1} parent=1 // pred_check_branch
      %26 = sbr.rel (0) target = $region9
    $region8: #{tpu_custom_call.1} parent=1 // pred_region
      %28 = vsyncadd [#allocation6], 0
      %s30 = sshll.u32 %s1, 4
      %s31 = int_to_ptr.hbm [resolvable:$true] %s30
      %s32 = sshll.u32 [#allocation5], 4
      %s33 = int_to_ptr.vmem [resolvable:$true] %s32
      %35 = dma.hbm_to_vmem [thread:$0]  %s31, 4096, %s33, [#allocation6]
    $region9: #{tpu_custom_call.1} parent=1 // pred_fallthru
      _
    // Predicated region
    $region10: #{tpu_custom_call.1} parent=1 // pred_check
      _
    $region11: #{tpu_custom_call.1} parent=1 // pred_check_branch
      %37 = sbr.rel (0) target = $region13
    $region12: #{tpu_custom_call.1} parent=1 // pred_region
      %39 = vsyncadd [#allocation6], 0
      %s40 = sshll.u32 %s2, 4
      %s41 = int_to_ptr.hbm [resolvable:$true] %s40
      %s42 = sshll.u32 [#allocation7], 4
      %s43 = int_to_ptr.vmem [resolvable:$true] %s42
      %48 = dma.hbm_to_vmem [thread:$0]  %s41, 65536, %s43, [#allocation6], 128, 128, 8
    $region13: #{tpu_custom_call.1} parent=1 // pred_fallthru
      _
    // Predicated region
    $region14: #{tpu_custom_call.1} parent=1 // pred_check
      _
    $region15: #{tpu_custom_call.1} parent=1 // pred_check_branch
      %50 = sbr.rel (0) target = $region17
    $region16: #{tpu_custom_call.1} parent=1 // pred_region
      %52 = vsyncadd [#allocation9], 0
      %s53 = sshll.u32 %s3, 4
      %s54 = int_to_ptr.hbm [resolvable:$true] %s53
      %s55 = sshll.u32 [#allocation8], 4
      %s56 = int_to_ptr.vmem [resolvable:$true] %s55
      %61 = dma.hbm_to_vmem [thread:$0]  %s54, 65536, %s56, [#allocation9], 128, 128, 8
    $region17: #{tpu_custom_call.1} parent=1 // pred_fallthru
      _
    // Predicated region
    $region18: #{tpu_custom_call.1} parent=1 // pred_check
      _
    $region19: #{tpu_custom_call.1} parent=1 // pred_check_branch
      %63 = sbr.rel (0) target = $region21
    $region20: #{tpu_custom_call.1} parent=1 // pred_region
      %65 = vsyncadd [#allocation9], 0
      %s67 = sshll.u32 %s4, 4
      %s68 = int_to_ptr.hbm [resolvable:$true] %s67
      %s69 = sshll.u32 [#allocation10], 4
      %s70 = int_to_ptr.vmem [resolvable:$true] %s69
      %72 = dma.hbm_to_vmem [thread:$0]  %s68, 128, %s70, [#allocation9]
    $region21: #{tpu_custom_call.1} parent=1 // pred_fallthru
      _
    // Predicated region
    $region22: #{tpu_custom_call.1} parent=1 // pred_check
      _
    $region23: #{tpu_custom_call.1} parent=1 // pred_check_branch
      %74 = sbr.rel (0) target = $region25
    $region24: #{tpu_custom_call.1} parent=1 // pred_region
      %76 = dma.done [#allocation3], 4096
    $region25: #{tpu_custom_call.1} parent=1 // pred_fallthru
      _
    // Predicated region
    $region26: #{tpu_custom_call.1} parent=1 // pred_check
      _
    $region27: #{tpu_custom_call.1} parent=1 // pred_check_branch
      %78 = sbr.rel (0) target = $region29
    $region28: #{tpu_custom_call.1} parent=1 // pred_region
      %80 = dma.done [#allocation6], 4096
    $region29: #{tpu_custom_call.1} parent=1 // pred_fallthru
      _
    // Predicated region
    $region30: #{tpu_custom_call.1} parent=1 // pred_check
      _
    $region31: #{tpu_custom_call.1} parent=1 // pred_check_branch
      %82 = sbr.rel (0) target = $region33
    $region32: #{tpu_custom_call.1} parent=1 // pred_region
      %84 = dma.done [#allocation6], 65536
    $region33: #{tpu_custom_call.1} parent=1 // pred_fallthru
      _
    // Predicated region
    $region34: #{tpu_custom_call.1} parent=1 // pred_check
      _
    $region35: #{tpu_custom_call.1} parent=1 // pred_check_branch
      %86 = sbr.rel (0) target = $region37
    $region36: #{tpu_custom_call.1} parent=1 // pred_region
      %88 = dma.done [#allocation9], 65536
    $region37: #{tpu_custom_call.1} parent=1 // pred_fallthru
      _
    // Predicated region
    $region38: #{tpu_custom_call.1} parent=1 // pred_check
      _
    $region39: #{tpu_custom_call.1} parent=1 // pred_check_branch
      %90 = sbr.rel (0) target = $region41
    $region40: #{tpu_custom_call.1} parent=1 // pred_region
      %92 = dma.done [#allocation9], 128
    $region41: #{tpu_custom_call.1} parent=1 // pred_fallthru
      _
    %v93 = vld [vmem:[#allocation2] sm:$0xff]
    %v94 = vld [vmem:[#allocation2 + $0x8] sm:$0xff]
    %v95 = vld [vmem:[#allocation2 + $0x10] sm:$0xff]
    %v96 = vld [vmem:[#allocation2 + $0x18] sm:$0xff]
    %v97 = vld [vmem:[#allocation2 + $0x20] sm:$0xff]
    %v98 = vld [vmem:[#allocation2 + $0x28] sm:$0xff]
    %v99 = vld [vmem:[#allocation2 + $0x30] sm:$0xff]
    %v100 = vld [vmem:[#allocation2 + $0x38] sm:$0xff]
    %v101 = vld [vmem:[#allocation2 + $0x40] sm:$0xff]
    %v102 = vld [vmem:[#allocation2 + $0x48] sm:$0xff]
    %v103 = vld [vmem:[#allocation2 + $0x50] sm:$0xff]
    %v104 = vld [vmem:[#allocation2 + $0x58] sm:$0xff]
    %v105 = vld [vmem:[#allocation2 + $0x60] sm:$0xff]
    %v106 = vld [vmem:[#allocation2 + $0x68] sm:$0xff]
    %v107 = vld [vmem:[#allocation2 + $0x70] sm:$0xff]
    %v108 = vld [vmem:[#allocation2 + $0x78] sm:$0xff]
    %v109 = vld [vmem:[#allocation2 + $0x80] sm:$0xff]
    %v110 = vld [vmem:[#allocation2 + $0x88] sm:$0xff]
    %v111 = vld [vmem:[#allocation2 + $0x90] sm:$0xff]
    %v112 = vld [vmem:[#allocation2 + $0x98] sm:$0xff]
    %v113 = vld [vmem:[#allocation2 + $0xa0] sm:$0xff]
    %v114 = vld [vmem:[#allocation2 + $0xa8] sm:$0xff]
    %v115 = vld [vmem:[#allocation2 + $0xb0] sm:$0xff]
    %v116 = vld [vmem:[#allocation2 + $0xb8] sm:$0xff]
    %v117 = vld [vmem:[#allocation2 + $0xc0] sm:$0xff]
    %v118 = vld [vmem:[#allocation2 + $0xc8] sm:$0xff]
    %v119 = vld [vmem:[#allocation2 + $0xd0] sm:$0xff]
    %v120 = vld [vmem:[#allocation2 + $0xd8] sm:$0xff]
    %v121 = vld [vmem:[#allocation2 + $0xe0] sm:$0xff]
    %v122 = vld [vmem:[#allocation2 + $0xe8] sm:$0xff]
    %v123 = vld [vmem:[#allocation2 + $0xf0] sm:$0xff]
    %v124 = vld [vmem:[#allocation2 + $0xf8] sm:$0xff]
    %v125 = vld [vmem:[#allocation5] sm:$0xff]
    %v126 = vld [vmem:[#allocation5 + $0x8] sm:$0xff]
    %v127 = vld [vmem:[#allocation5 + $0x10] sm:$0xff]
    %v128 = vld [vmem:[#allocation5 + $0x18] sm:$0xff]
    %v129 = vld [vmem:[#allocation5 + $0x20] sm:$0xff]
    %v130 = vld [vmem:[#allocation5 + $0x28] sm:$0xff]
    %v131 = vld [vmem:[#allocation5 + $0x30] sm:$0xff]
    %v132 = vld [vmem:[#allocation5 + $0x38] sm:$0xff]
    %v133 = vld [vmem:[#allocation5 + $0x40] sm:$0xff]
    %v134 = vld [vmem:[#allocation5 + $0x48] sm:$0xff]
    %v135 = vld [vmem:[#allocation5 + $0x50] sm:$0xff]
    %v136 = vld [vmem:[#allocation5 + $0x58] sm:$0xff]
    %v137 = vld [vmem:[#allocation5 + $0x60] sm:$0xff]
    %v138 = vld [vmem:[#allocation5 + $0x68] sm:$0xff]
    %v139 = vld [vmem:[#allocation5 + $0x70] sm:$0xff]
    %v140 = vld [vmem:[#allocation5 + $0x78] sm:$0xff]
    %v141 = vld [vmem:[#allocation5 + $0x80] sm:$0xff]
    %v142 = vld [vmem:[#allocation5 + $0x88] sm:$0xff]
    %v143 = vld [vmem:[#allocation5 + $0x90] sm:$0xff]
    %v144 = vld [vmem:[#allocation5 + $0x98] sm:$0xff]
    %v145 = vld [vmem:[#allocation5 + $0xa0] sm:$0xff]
    %v146 = vld [vmem:[#allocation5 + $0xa8] sm:$0xff]
    %v147 = vld [vmem:[#allocation5 + $0xb0] sm:$0xff]
    %v148 = vld [vmem:[#allocation5 + $0xb8] sm:$0xff]
    %v149 = vld [vmem:[#allocation5 + $0xc0] sm:$0xff]
    %v150 = vld [vmem:[#allocation5 + $0xc8] sm:$0xff]
    %v151 = vld [vmem:[#allocation5 + $0xd0] sm:$0xff]
    %v152 = vld [vmem:[#allocation5 + $0xd8] sm:$0xff]
    %v153 = vld [vmem:[#allocation5 + $0xe0] sm:$0xff]
    %v154 = vld [vmem:[#allocation5 + $0xe8] sm:$0xff]
    %v155 = vld [vmem:[#allocation5 + $0xf0] sm:$0xff]
    %v156 = vld [vmem:[#allocation5 + $0xf8] sm:$0xff]
    %v157 = vld [vmem:[#allocation7] sm:$0xff]
    %v158 = vld [vmem:[#allocation7 + $0x8] sm:$0xff]
    %v159 = vld [vmem:[#allocation7 + $0x10] sm:$0xff]
    %v160 = vld [vmem:[#allocation7 + $0x18] sm:$0xff]
    %v161 = vld [vmem:[#allocation7 + $0x20] sm:$0xff]
    %v162 = vld [vmem:[#allocation7 + $0x28] sm:$0xff]
    %v163 = vld [vmem:[#allocation7 + $0x30] sm:$0xff]
    %v164 = vld [vmem:[#allocation7 + $0x38] sm:$0xff]
    %v165 = vld [vmem:[#allocation7 + $0x40] sm:$0xff]
    %v166 = vld [vmem:[#allocation7 + $0x48] sm:$0xff]
    %v167 = vld [vmem:[#allocation7 + $0x50] sm:$0xff]
    %v168 = vld [vmem:[#allocation7 + $0x58] sm:$0xff]
    %v169 = vld [vmem:[#allocation7 + $0x60] sm:$0xff]
    %v170 = vld [vmem:[#allocation7 + $0x68] sm:$0xff]
    %v171 = vld [vmem:[#allocation7 + $0x70] sm:$0xff]
    %v172 = vld [vmem:[#allocation7 + $0x78] sm:$0xff]
    %v173 = vld [vmem:[#allocation7 + $0x80] sm:$0xff]
    %v174 = vld [vmem:[#allocation7 + $0x88] sm:$0xff]
    %v175 = vld [vmem:[#allocation7 + $0x90] sm:$0xff]
    %v176 = vld [vmem:[#allocation7 + $0x98] sm:$0xff]
    %v177 = vld [vmem:[#allocation7 + $0xa0] sm:$0xff]
    %v178 = vld [vmem:[#allocation7 + $0xa8] sm:$0xff]
    %v179 = vld [vmem:[#allocation7 + $0xb0] sm:$0xff]
    %v180 = vld [vmem:[#allocation7 + $0xb8] sm:$0xff]
    %v181 = vld [vmem:[#allocation7 + $0xc0] sm:$0xff]
    %v182 = vld [vmem:[#allocation7 + $0xc8] sm:$0xff]
    %v183 = vld [vmem:[#allocation7 + $0xd0] sm:$0xff]
    %v184 = vld [vmem:[#allocation7 + $0xd8] sm:$0xff]
    %v185 = vld [vmem:[#allocation7 + $0xe0] sm:$0xff]
    %v186 = vld [vmem:[#allocation7 + $0xe8] sm:$0xff]
    %v187 = vld [vmem:[#allocation7 + $0xf0] sm:$0xff]
    %v188 = vld [vmem:[#allocation7 + $0xf8] sm:$0xff]
    %v189 = vld [vmem:[#allocation7 + $0x100] sm:$0xff]
    %v190 = vld [vmem:[#allocation7 + $0x108] sm:$0xff]
    %v191 = vld [vmem:[#allocation7 + $0x110] sm:$0xff]
    %v192 = vld [vmem:[#allocation7 + $0x118] sm:$0xff]
    %v193 = vld [vmem:[#allocation7 + $0x120] sm:$0xff]
    %v194 = vld [vmem:[#allocation7 + $0x128] sm:$0xff]
    %v195 = vld [vmem:[#allocation7 + $0x130] sm:$0xff]
    %v196 = vld [vmem:[#allocation7 + $0x138] sm:$0xff]
    %v197 = vld [vmem:[#allocation7 + $0x140] sm:$0xff]
    %v198 = vld [vmem:[#allocation7 + $0x148] sm:$0xff]
    %v199 = vld [vmem:[#allocation7 + $0x150] sm:$0xff]
    %v200 = vld [vmem:[#allocation7 + $0x158] sm:$0xff]
    %v201 = vld [vmem:[#allocation7 + $0x160] sm:$0xff]
    %v202 = vld [vmem:[#allocation7 + $0x168] sm:$0xff]
    %v203 = vld [vmem:[#allocation7 + $0x170] sm:$0xff]
    %v204 = vld [vmem:[#allocation7 + $0x178] sm:$0xff]
    %v205 = vld [vmem:[#allocation7 + $0x180] sm:$0xff]
    %v206 = vld [vmem:[#allocation7 + $0x188] sm:$0xff]
    %v207 = vld [vmem:[#allocation7 + $0x190] sm:$0xff]
    %v208 = vld [vmem:[#allocation7 + $0x198] sm:$0xff]
    %v209 = vld [vmem:[#allocation7 + $0x1a0] sm:$0xff]
    %v210 = vld [vmem:[#allocation7 + $0x1a8] sm:$0xff]
    %v211 = vld [vmem:[#allocation7 + $0x1b0] sm:$0xff]
    %v212 = vld [vmem:[#allocation7 + $0x1b8] sm:$0xff]
    %v213 = vld [vmem:[#allocation7 + $0x1c0] sm:$0xff]
    %v214 = vld [vmem:[#allocation7 + $0x1c8] sm:$0xff]
    %v215 = vld [vmem:[#allocation7 + $0x1d0] sm:$0xff]
    %v216 = vld [vmem:[#allocation7 + $0x1d8] sm:$0xff]
    %v217 = vld [vmem:[#allocation7 + $0x1e0] sm:$0xff]
    %v218 = vld [vmem:[#allocation7 + $0x1e8] sm:$0xff]
    %v219 = vld [vmem:[#allocation7 + $0x1f0] sm:$0xff]
    %v220 = vld [vmem:[#allocation7 + $0x1f8] sm:$0xff]
    %v221 = vld [vmem:[#allocation7 + $0x200] sm:$0xff]
    %v222 = vld [vmem:[#allocation7 + $0x208] sm:$0xff]
    %v223 = vld [vmem:[#allocation7 + $0x210] sm:$0xff]
    %v224 = vld [vmem:[#allocation7 + $0x218] sm:$0xff]
    %v225 = vld [vmem:[#allocation7 + $0x220] sm:$0xff]
    %v226 = vld [vmem:[#allocation7 + $0x228] sm:$0xff]
    %v227 = vld [vmem:[#allocation7 + $0x230] sm:$0xff]
    %v228 = vld [vmem:[#allocation7 + $0x238] sm:$0xff]
    %v229 = vld [vmem:[#allocation7 + $0x240] sm:$0xff]
    %v230 = vld [vmem:[#allocation7 + $0x248] sm:$0xff]
    %v231 = vld [vmem:[#allocation7 + $0x250] sm:$0xff]
    %v232 = vld [vmem:[#allocation7 + $0x258] sm:$0xff]
    %v233 = vld [vmem:[#allocation7 + $0x260] sm:$0xff]
    %v234 = vld [vmem:[#allocation7 + $0x268] sm:$0xff]
    %v235 = vld [vmem:[#allocation7 + $0x270] sm:$0xff]
    %v236 = vld [vmem:[#allocation7 + $0x278] sm:$0xff]
    %v237 = vld [vmem:[#allocation7 + $0x280] sm:$0xff]
    %v238 = vld [vmem:[#allocation7 + $0x288] sm:$0xff]
    %v239 = vld [vmem:[#allocation7 + $0x290] sm:$0xff]
    %v240 = vld [vmem:[#allocation7 + $0x298] sm:$0xff]
    %v241 = vld [vmem:[#allocation7 + $0x2a0] sm:$0xff]
    %v242 = vld [vmem:[#allocation7 + $0x2a8] sm:$0xff]
    %v243 = vld [vmem:[#allocation7 + $0x2b0] sm:$0xff]
    %v244 = vld [vmem:[#allocation7 + $0x2b8] sm:$0xff]
    %v245 = vld [vmem:[#allocation7 + $0x2c0] sm:$0xff]
    %v246 = vld [vmem:[#allocation7 + $0x2c8] sm:$0xff]
    %v247 = vld [vmem:[#allocation7 + $0x2d0] sm:$0xff]
    %v248 = vld [vmem:[#allocation7 + $0x2d8] sm:$0xff]
    %v249 = vld [vmem:[#allocation7 + $0x2e0] sm:$0xff]
    %v250 = vld [vmem:[#allocation7 + $0x2e8] sm:$0xff]
    %v251 = vld [vmem:[#allocation7 + $0x2f0] sm:$0xff]
    %v252 = vld [vmem:[#allocation7 + $0x2f8] sm:$0xff]
    %v253 = vld [vmem:[#allocation7 + $0x300] sm:$0xff]
    %v254 = vld [vmem:[#allocation7 + $0x308] sm:$0xff]
    %v255 = vld [vmem:[#allocation7 + $0x310] sm:$0xff]
    %v256 = vld [vmem:[#allocation7 + $0x318] sm:$0xff]
    %v257 = vld [vmem:[#allocation7 + $0x320] sm:$0xff]
    %v258 = vld [vmem:[#allocation7 + $0x328] sm:$0xff]
    %v259 = vld [vmem:[#allocation7 + $0x330] sm:$0xff]
    %v260 = vld [vmem:[#allocation7 + $0x338] sm:$0xff]
    %v261 = vld [vmem:[#allocation7 + $0x340] sm:$0xff]
    %v262 = vld [vmem:[#allocation7 + $0x348] sm:$0xff]
    %v263 = vld [vmem:[#allocation7 + $0x350] sm:$0xff]
    %v264 = vld [vmem:[#allocation7 + $0x358] sm:$0xff]
    %v265 = vld [vmem:[#allocation7 + $0x360] sm:$0xff]
    %v266 = vld [vmem:[#allocation7 + $0x368] sm:$0xff]
    %v267 = vld [vmem:[#allocation7 + $0x370] sm:$0xff]
    %v268 = vld [vmem:[#allocation7 + $0x378] sm:$0xff]
    %v269 = vld [vmem:[#allocation7 + $0x380] sm:$0xff]
    %v270 = vld [vmem:[#allocation7 + $0x388] sm:$0xff]
    %v271 = vld [vmem:[#allocation7 + $0x390] sm:$0xff]
    %v272 = vld [vmem:[#allocation7 + $0x398] sm:$0xff]
    %v273 = vld [vmem:[#allocation7 + $0x3a0] sm:$0xff]
    %v274 = vld [vmem:[#allocation7 + $0x3a8] sm:$0xff]
    %v275 = vld [vmem:[#allocation7 + $0x3b0] sm:$0xff]
    %v276 = vld [vmem:[#allocation7 + $0x3b8] sm:$0xff]
    %v277 = vld [vmem:[#allocation7 + $0x3c0] sm:$0xff]
    %v278 = vld [vmem:[#allocation7 + $0x3c8] sm:$0xff]
    %v279 = vld [vmem:[#allocation7 + $0x3d0] sm:$0xff]
    %v280 = vld [vmem:[#allocation7 + $0x3d8] sm:$0xff]
    %v281 = vld [vmem:[#allocation7 + $0x3e0] sm:$0xff]
    %v282 = vld [vmem:[#allocation7 + $0x3e8] sm:$0xff]
    %v283 = vld [vmem:[#allocation7 + $0x3f0] sm:$0xff]
    %v284 = vld [vmem:[#allocation7 + $0x3f8] sm:$0xff]
    %v285 = vld [vmem:[#allocation7 + $0x400] sm:$0xff]
    %v286 = vld [vmem:[#allocation7 + $0x408] sm:$0xff]
    %v287 = vld [vmem:[#allocation7 + $0x410] sm:$0xff]
    %v288 = vld [vmem:[#allocation7 + $0x418] sm:$0xff]
    %v289 = vld [vmem:[#allocation7 + $0x420] sm:$0xff]
    %v290 = vld [vmem:[#allocation7 + $0x428] sm:$0xff]
    %v291 = vld [vmem:[#allocation7 + $0x430] sm:$0xff]
    %v292 = vld [vmem:[#allocation7 + $0x438] sm:$0xff]
    %v293 = vld [vmem:[#allocation7 + $0x440] sm:$0xff]
    %v294 = vld [vmem:[#allocation7 + $0x448] sm:$0xff]
    %v295 = vld [vmem:[#allocation7 + $0x450] sm:$0xff]
    %v296 = vld [vmem:[#allocation7 + $0x458] sm:$0xff]
    %v297 = vld [vmem:[#allocation7 + $0x460] sm:$0xff]
    %v298 = vld [vmem:[#allocation7 + $0x468] sm:$0xff]
    %v299 = vld [vmem:[#allocation7 + $0x470] sm:$0xff]
    %v300 = vld [vmem:[#allocation7 + $0x478] sm:$0xff]
    %v301 = vld [vmem:[#allocation7 + $0x480] sm:$0xff]
    %v302 = vld [vmem:[#allocation7 + $0x488] sm:$0xff]
    %v303 = vld [vmem:[#allocation7 + $0x490] sm:$0xff]
    %v304 = vld [vmem:[#allocation7 + $0x498] sm:$0xff]
    %v305 = vld [vmem:[#allocation7 + $0x4a0] sm:$0xff]
    %v306 = vld [vmem:[#allocation7 + $0x4a8] sm:$0xff]
    %v307 = vld [vmem:[#allocation7 + $0x4b0] sm:$0xff]
    %v308 = vld [vmem:[#allocation7 + $0x4b8] sm:$0xff]
    %v309 = vld [vmem:[#allocation7 + $0x4c0] sm:$0xff]
    %v310 = vld [vmem:[#allocation7 + $0x4c8] sm:$0xff]
    %v311 = vld [vmem:[#allocation7 + $0x4d0] sm:$0xff]
    %v312 = vld [vmem:[#allocation7 + $0x4d8] sm:$0xff]
    %v313 = vld [vmem:[#allocation7 + $0x4e0] sm:$0xff]
    %v314 = vld [vmem:[#allocation7 + $0x4e8] sm:$0xff]
    %v315 = vld [vmem:[#allocation7 + $0x4f0] sm:$0xff]
    %v316 = vld [vmem:[#allocation7 + $0x4f8] sm:$0xff]
    %v317 = vld [vmem:[#allocation7 + $0x500] sm:$0xff]
    %v318 = vld [vmem:[#allocation7 + $0x508] sm:$0xff]
    %v319 = vld [vmem:[#allocation7 + $0x510] sm:$0xff]
    %v320 = vld [vmem:[#allocation7 + $0x518] sm:$0xff]
    %v321 = vld [vmem:[#allocation7 + $0x520] sm:$0xff]
    %v322 = vld [vmem:[#allocation7 + $0x528] sm:$0xff]
    %v323 = vld [vmem:[#allocation7 + $0x530] sm:$0xff]
    %v324 = vld [vmem:[#allocation7 + $0x538] sm:$0xff]
    %v325 = vld [vmem:[#allocation7 + $0x540] sm:$0xff]
    %v326 = vld [vmem:[#allocation7 + $0x548] sm:$0xff]
    %v327 = vld [vmem:[#allocation7 + $0x550] sm:$0xff]
    %v328 = vld [vmem:[#allocation7 + $0x558] sm:$0xff]
    %v329 = vld [vmem:[#allocation7 + $0x560] sm:$0xff]
    %v330 = vld [vmem:[#allocation7 + $0x568] sm:$0xff]
    %v331 = vld [vmem:[#allocation7 + $0x570] sm:$0xff]
    %v332 = vld [vmem:[#allocation7 + $0x578] sm:$0xff]
    %v333 = vld [vmem:[#allocation7 + $0x580] sm:$0xff]
    %v334 = vld [vmem:[#allocation7 + $0x588] sm:$0xff]
    %v335 = vld [vmem:[#allocation7 + $0x590] sm:$0xff]
    %v336 = vld [vmem:[#allocation7 + $0x598] sm:$0xff]
    %v337 = vld [vmem:[#allocation7 + $0x5a0] sm:$0xff]
    %v338 = vld [vmem:[#allocation7 + $0x5a8] sm:$0xff]
    %v339 = vld [vmem:[#allocation7 + $0x5b0] sm:$0xff]
    %v340 = vld [vmem:[#allocation7 + $0x5b8] sm:$0xff]
    %v341 = vld [vmem:[#allocation7 + $0x5c0] sm:$0xff]
    %v342 = vld [vmem:[#allocation7 + $0x5c8] sm:$0xff]
    %v343 = vld [vmem:[#allocation7 + $0x5d0] sm:$0xff]
    %v344 = vld [vmem:[#allocation7 + $0x5d8] sm:$0xff]
    %v345 = vld [vmem:[#allocation7 + $0x5e0] sm:$0xff]
    %v346 = vld [vmem:[#allocation7 + $0x5e8] sm:$0xff]
    %v347 = vld [vmem:[#allocation7 + $0x5f0] sm:$0xff]
    %v348 = vld [vmem:[#allocation7 + $0x5f8] sm:$0xff]
    %v349 = vld [vmem:[#allocation7 + $0x600] sm:$0xff]
    %v350 = vld [vmem:[#allocation7 + $0x608] sm:$0xff]
    %v351 = vld [vmem:[#allocation7 + $0x610] sm:$0xff]
    %v352 = vld [vmem:[#allocation7 + $0x618] sm:$0xff]
    %v353 = vld [vmem:[#allocation7 + $0x620] sm:$0xff]
    %v354 = vld [vmem:[#allocation7 + $0x628] sm:$0xff]
    %v355 = vld [vmem:[#allocation7 + $0x630] sm:$0xff]
    %v356 = vld [vmem:[#allocation7 + $0x638] sm:$0xff]
    %v357 = vld [vmem:[#allocation7 + $0x640] sm:$0xff]
    %v358 = vld [vmem:[#allocation7 + $0x648] sm:$0xff]
    %v359 = vld [vmem:[#allocation7 + $0x650] sm:$0xff]
    %v360 = vld [vmem:[#allocation7 + $0x658] sm:$0xff]
    %v361 = vld [vmem:[#allocation7 + $0x660] sm:$0xff]
    %v362 = vld [vmem:[#allocation7 + $0x668] sm:$0xff]
    %v363 = vld [vmem:[#allocation7 + $0x670] sm:$0xff]
    %v364 = vld [vmem:[#allocation7 + $0x678] sm:$0xff]
    %v365 = vld [vmem:[#allocation7 + $0x680] sm:$0xff]
    %v366 = vld [vmem:[#allocation7 + $0x688] sm:$0xff]
    %v367 = vld [vmem:[#allocation7 + $0x690] sm:$0xff]
    %v368 = vld [vmem:[#allocation7 + $0x698] sm:$0xff]
    %v369 = vld [vmem:[#allocation7 + $0x6a0] sm:$0xff]
    %v370 = vld [vmem:[#allocation7 + $0x6a8] sm:$0xff]
    %v371 = vld [vmem:[#allocation7 + $0x6b0] sm:$0xff]
    %v372 = vld [vmem:[#allocation7 + $0x6b8] sm:$0xff]
    %v373 = vld [vmem:[#allocation7 + $0x6c0] sm:$0xff]
    %v374 = vld [vmem:[#allocation7 + $0x6c8] sm:$0xff]
    %v375 = vld [vmem:[#allocation7 + $0x6d0] sm:$0xff]
    %v376 = vld [vmem:[#allocation7 + $0x6d8] sm:$0xff]
    %v377 = vld [vmem:[#allocation7 + $0x6e0] sm:$0xff]
    %v378 = vld [vmem:[#allocation7 + $0x6e8] sm:$0xff]
    %v379 = vld [vmem:[#allocation7 + $0x6f0] sm:$0xff]
    %v380 = vld [vmem:[#allocation7 + $0x6f8] sm:$0xff]
    %v381 = vld [vmem:[#allocation7 + $0x700] sm:$0xff]
    %v382 = vld [vmem:[#allocation7 + $0x708] sm:$0xff]
    %v383 = vld [vmem:[#allocation7 + $0x710] sm:$0xff]
    %v384 = vld [vmem:[#allocation7 + $0x718] sm:$0xff]
    %v385 = vld [vmem:[#allocation7 + $0x720] sm:$0xff]
    %v386 = vld [vmem:[#allocation7 + $0x728] sm:$0xff]
    %v387 = vld [vmem:[#allocation7 + $0x730] sm:$0xff]
    %v388 = vld [vmem:[#allocation7 + $0x738] sm:$0xff]
    %v389 = vld [vmem:[#allocation7 + $0x740] sm:$0xff]
    %v390 = vld [vmem:[#allocation7 + $0x748] sm:$0xff]
    %v391 = vld [vmem:[#allocation7 + $0x750] sm:$0xff]
    %v392 = vld [vmem:[#allocation7 + $0x758] sm:$0xff]
    %v393 = vld [vmem:[#allocation7 + $0x760] sm:$0xff]
    %v394 = vld [vmem:[#allocation7 + $0x768] sm:$0xff]
    %v395 = vld [vmem:[#allocation7 + $0x770] sm:$0xff]
    %v396 = vld [vmem:[#allocation7 + $0x778] sm:$0xff]
    %v397 = vld [vmem:[#allocation7 + $0x780] sm:$0xff]
    %v398 = vld [vmem:[#allocation7 + $0x788] sm:$0xff]
    %v399 = vld [vmem:[#allocation7 + $0x790] sm:$0xff]
    %v400 = vld [vmem:[#allocation7 + $0x798] sm:$0xff]
    %v401 = vld [vmem:[#allocation7 + $0x7a0] sm:$0xff]
    %v402 = vld [vmem:[#allocation7 + $0x7a8] sm:$0xff]
    %v403 = vld [vmem:[#allocation7 + $0x7b0] sm:$0xff]
    %v404 = vld [vmem:[#allocation7 + $0x7b8] sm:$0xff]
    %v405 = vld [vmem:[#allocation7 + $0x7c0] sm:$0xff]
    %v406 = vld [vmem:[#allocation7 + $0x7c8] sm:$0xff]
    %v407 = vld [vmem:[#allocation7 + $0x7d0] sm:$0xff]
    %v408 = vld [vmem:[#allocation7 + $0x7d8] sm:$0xff]
    %v409 = vld [vmem:[#allocation7 + $0x7e0] sm:$0xff]
    %v410 = vld [vmem:[#allocation7 + $0x7e8] sm:$0xff]
    %v411 = vld [vmem:[#allocation7 + $0x7f0] sm:$0xff]
    %v412 = vld [vmem:[#allocation7 + $0x7f8] sm:$0xff]
    %v413 = vld [vmem:[#allocation7 + $0x800] sm:$0xff]
    %v414 = vld [vmem:[#allocation7 + $0x808] sm:$0xff]
    %v415 = vld [vmem:[#allocation7 + $0x810] sm:$0xff]
    %v416 = vld [vmem:[#allocation7 + $0x818] sm:$0xff]
    %v417 = vld [vmem:[#allocation7 + $0x820] sm:$0xff]
    %v418 = vld [vmem:[#allocation7 + $0x828] sm:$0xff]
    %v419 = vld [vmem:[#allocation7 + $0x830] sm:$0xff]
    %v420 = vld [vmem:[#allocation7 + $0x838] sm:$0xff]
    %v421 = vld [vmem:[#allocation7 + $0x840] sm:$0xff]
    %v422 = vld [vmem:[#allocation7 + $0x848] sm:$0xff]
    %v423 = vld [vmem:[#allocation7 + $0x850] sm:$0xff]
    %v424 = vld [vmem:[#allocation7 + $0x858] sm:$0xff]
    %v425 = vld [vmem:[#allocation7 + $0x860] sm:$0xff]
    %v426 = vld [vmem:[#allocation7 + $0x868] sm:$0xff]
    %v427 = vld [vmem:[#allocation7 + $0x870] sm:$0xff]
    %v428 = vld [vmem:[#allocation7 + $0x878] sm:$0xff]
    %v429 = vld [vmem:[#allocation7 + $0x880] sm:$0xff]
    %v430 = vld [vmem:[#allocation7 + $0x888] sm:$0xff]
    %v431 = vld [vmem:[#allocation7 + $0x890] sm:$0xff]
    %v432 = vld [vmem:[#allocation7 + $0x898] sm:$0xff]
    %v433 = vld [vmem:[#allocation7 + $0x8a0] sm:$0xff]
    %v434 = vld [vmem:[#allocation7 + $0x8a8] sm:$0xff]
    %v435 = vld [vmem:[#allocation7 + $0x8b0] sm:$0xff]
    %v436 = vld [vmem:[#allocation7 + $0x8b8] sm:$0xff]
    %v437 = vld [vmem:[#allocation7 + $0x8c0] sm:$0xff]
    %v438 = vld [vmem:[#allocation7 + $0x8c8] sm:$0xff]
    %v439 = vld [vmem:[#allocation7 + $0x8d0] sm:$0xff]
    %v440 = vld [vmem:[#allocation7 + $0x8d8] sm:$0xff]
    %v441 = vld [vmem:[#allocation7 + $0x8e0] sm:$0xff]
    %v442 = vld [vmem:[#allocation7 + $0x8e8] sm:$0xff]
    %v443 = vld [vmem:[#allocation7 + $0x8f0] sm:$0xff]
    %v444 = vld [vmem:[#allocation7 + $0x8f8] sm:$0xff]
    %v445 = vld [vmem:[#allocation7 + $0x900] sm:$0xff]
    %v446 = vld [vmem:[#allocation7 + $0x908] sm:$0xff]
    %v447 = vld [vmem:[#allocation7 + $0x910] sm:$0xff]
    %v448 = vld [vmem:[#allocation7 + $0x918] sm:$0xff]
    %v449 = vld [vmem:[#allocation7 + $0x920] sm:$0xff]
    %v450 = vld [vmem:[#allocation7 + $0x928] sm:$0xff]
    %v451 = vld [vmem:[#allocation7 + $0x930] sm:$0xff]
    %v452 = vld [vmem:[#allocation7 + $0x938] sm:$0xff]
    %v453 = vld [vmem:[#allocation7 + $0x940] sm:$0xff]
    %v454 = vld [vmem:[#allocation7 + $0x948] sm:$0xff]
    %v455 = vld [vmem:[#allocation7 + $0x950] sm:$0xff]
    %v456 = vld [vmem:[#allocation7 + $0x958] sm:$0xff]
    %v457 = vld [vmem:[#allocation7 + $0x960] sm:$0xff]
    %v458 = vld [vmem:[#allocation7 + $0x968] sm:$0xff]
    %v459 = vld [vmem:[#allocation7 + $0x970] sm:$0xff]
    %v460 = vld [vmem:[#allocation7 + $0x978] sm:$0xff]
    %v461 = vld [vmem:[#allocation7 + $0x980] sm:$0xff]
    %v462 = vld [vmem:[#allocation7 + $0x988] sm:$0xff]
    %v463 = vld [vmem:[#allocation7 + $0x990] sm:$0xff]
    %v464 = vld [vmem:[#allocation7 + $0x998] sm:$0xff]
    %v465 = vld [vmem:[#allocation7 + $0x9a0] sm:$0xff]
    %v466 = vld [vmem:[#allocation7 + $0x9a8] sm:$0xff]
    %v467 = vld [vmem:[#allocation7 + $0x9b0] sm:$0xff]
    %v468 = vld [vmem:[#allocation7 + $0x9b8] sm:$0xff]
    %v469 = vld [vmem:[#allocation7 + $0x9c0] sm:$0xff]
    %v470 = vld [vmem:[#allocation7 + $0x9c8] sm:$0xff]
    %v471 = vld [vmem:[#allocation7 + $0x9d0] sm:$0xff]
    %v472 = vld [vmem:[#allocation7 + $0x9d8] sm:$0xff]
    %v473 = vld [vmem:[#allocation7 + $0x9e0] sm:$0xff]
    %v474 = vld [vmem:[#allocation7 + $0x9e8] sm:$0xff]
    %v475 = vld [vmem:[#allocation7 + $0x9f0] sm:$0xff]
    %v476 = vld [vmem:[#allocation7 + $0x9f8] sm:$0xff]
    %v477 = vld [vmem:[#allocation7 + $0xa00] sm:$0xff]
    %v478 = vld [vmem:[#allocation7 + $0xa08] sm:$0xff]
    %v479 = vld [vmem:[#allocation7 + $0xa10] sm:$0xff]
    %v480 = vld [vmem:[#allocation7 + $0xa18] sm:$0xff]
    %v481 = vld [vmem:[#allocation7 + $0xa20] sm:$0xff]
    %v482 = vld [vmem:[#allocation7 + $0xa28] sm:$0xff]
    %v483 = vld [vmem:[#allocation7 + $0xa30] sm:$0xff]
    %v484 = vld [vmem:[#allocation7 + $0xa38] sm:$0xff]
    %v485 = vld [vmem:[#allocation7 + $0xa40] sm:$0xff]
    %v486 = vld [vmem:[#allocation7 + $0xa48] sm:$0xff]
    %v487 = vld [vmem:[#allocation7 + $0xa50] sm:$0xff]
    %v488 = vld [vmem:[#allocation7 + $0xa58] sm:$0xff]
    %v489 = vld [vmem:[#allocation7 + $0xa60] sm:$0xff]
    %v490 = vld [vmem:[#allocation7 + $0xa68] sm:$0xff]
    %v491 = vld [vmem:[#allocation7 + $0xa70] sm:$0xff]
    %v492 = vld [vmem:[#allocation7 + $0xa78] sm:$0xff]
    %v493 = vld [vmem:[#allocation7 + $0xa80] sm:$0xff]
    %v494 = vld [vmem:[#allocation7 + $0xa88] sm:$0xff]
    %v495 = vld [vmem:[#allocation7 + $0xa90] sm:$0xff]
    %v496 = vld [vmem:[#allocation7 + $0xa98] sm:$0xff]
    %v497 = vld [vmem:[#allocation7 + $0xaa0] sm:$0xff]
    %v498 = vld [vmem:[#allocation7 + $0xaa8] sm:$0xff]
    %v499 = vld [vmem:[#allocation7 + $0xab0] sm:$0xff]
    %v500 = vld [vmem:[#allocation7 + $0xab8] sm:$0xff]
    %v501 = vld [vmem:[#allocation7 + $0xac0] sm:$0xff]
    %v502 = vld [vmem:[#allocation7 + $0xac8] sm:$0xff]
    %v503 = vld [vmem:[#allocation7 + $0xad0] sm:$0xff]
    %v504 = vld [vmem:[#allocation7 + $0xad8] sm:$0xff]
    %v505 = vld [vmem:[#allocation7 + $0xae0] sm:$0xff]
    %v506 = vld [vmem:[#allocation7 + $0xae8] sm:$0xff]
    %v507 = vld [vmem:[#allocation7 + $0xaf0] sm:$0xff]
    %v508 = vld [vmem:[#allocation7 + $0xaf8] sm:$0xff]
    %v509 = vld [vmem:[#allocation7 + $0xb00] sm:$0xff]
    %v510 = vld [vmem:[#allocation7 + $0xb08] sm:$0xff]
    %v511 = vld [vmem:[#allocation7 + $0xb10] sm:$0xff]
    %v512 = vld [vmem:[#allocation7 + $0xb18] sm:$0xff]
    %v513 = vld [vmem:[#allocation7 + $0xb20] sm:$0xff]
    %v514 = vld [vmem:[#allocation7 + $0xb28] sm:$0xff]
    %v515 = vld [vmem:[#allocation7 + $0xb30] sm:$0xff]
    %v516 = vld [vmem:[#allocation7 + $0xb38] sm:$0xff]
    %v517 = vld [vmem:[#allocation7 + $0xb40] sm:$0xff]
    %v518 = vld [vmem:[#allocation7 + $0xb48] sm:$0xff]
    %v519 = vld [vmem:[#allocation7 + $0xb50] sm:$0xff]
    %v520 = vld [vmem:[#allocation7 + $0xb58] sm:$0xff]
    %v521 = vld [vmem:[#allocation7 + $0xb60] sm:$0xff]
    %v522 = vld [vmem:[#allocation7 + $0xb68] sm:$0xff]
    %v523 = vld [vmem:[#allocation7 + $0xb70] sm:$0xff]
    %v524 = vld [vmem:[#allocation7 + $0xb78] sm:$0xff]
    %v525 = vld [vmem:[#allocation7 + $0xb80] sm:$0xff]
    %v526 = vld [vmem:[#allocation7 + $0xb88] sm:$0xff]
    %v527 = vld [vmem:[#allocation7 + $0xb90] sm:$0xff]
    %v528 = vld [vmem:[#allocation7 + $0xb98] sm:$0xff]
    %v529 = vld [vmem:[#allocation7 + $0xba0] sm:$0xff]
    %v530 = vld [vmem:[#allocation7 + $0xba8] sm:$0xff]
    %v531 = vld [vmem:[#allocation7 + $0xbb0] sm:$0xff]
    %v532 = vld [vmem:[#allocation7 + $0xbb8] sm:$0xff]
    %v533 = vld [vmem:[#allocation7 + $0xbc0] sm:$0xff]
    %v534 = vld [vmem:[#allocation7 + $0xbc8] sm:$0xff]
    %v535 = vld [vmem:[#allocation7 + $0xbd0] sm:$0xff]
    %v536 = vld [vmem:[#allocation7 + $0xbd8] sm:$0xff]
    %v537 = vld [vmem:[#allocation7 + $0xbe0] sm:$0xff]
    %v538 = vld [vmem:[#allocation7 + $0xbe8] sm:$0xff]
    %v539 = vld [vmem:[#allocation7 + $0xbf0] sm:$0xff]
    %v540 = vld [vmem:[#allocation7 + $0xbf8] sm:$0xff]
    %v541 = vld [vmem:[#allocation7 + $0xc00] sm:$0xff]
    %v542 = vld [vmem:[#allocation7 + $0xc08] sm:$0xff]
    %v543 = vld [vmem:[#allocation7 + $0xc10] sm:$0xff]
    %v544 = vld [vmem:[#allocation7 + $0xc18] sm:$0xff]
    %v545 = vld [vmem:[#allocation7 + $0xc20] sm:$0xff]
    %v546 = vld [vmem:[#allocation7 + $0xc28] sm:$0xff]
    %v547 = vld [vmem:[#allocation7 + $0xc30] sm:$0xff]
    %v548 = vld [vmem:[#allocation7 + $0xc38] sm:$0xff]
    %v549 = vld [vmem:[#allocation7 + $0xc40] sm:$0xff]
    %v550 = vld [vmem:[#allocation7 + $0xc48] sm:$0xff]
    %v551 = vld [vmem:[#allocation7 + $0xc50] sm:$0xff]
    %v552 = vld [vmem:[#allocation7 + $0xc58] sm:$0xff]
    %v553 = vld [vmem:[#allocation7 + $0xc60] sm:$0xff]
    %v554 = vld [vmem:[#allocation7 + $0xc68] sm:$0xff]
    %v555 = vld [vmem:[#allocation7 + $0xc70] sm:$0xff]
    %v556 = vld [vmem:[#allocation7 + $0xc78] sm:$0xff]
    %v557 = vld [vmem:[#allocation7 + $0xc80] sm:$0xff]
    %v558 = vld [vmem:[#allocation7 + $0xc88] sm:$0xff]
    %v559 = vld [vmem:[#allocation7 + $0xc90] sm:$0xff]
    %v560 = vld [vmem:[#allocation7 + $0xc98] sm:$0xff]
    %v561 = vld [vmem:[#allocation7 + $0xca0] sm:$0xff]
    %v562 = vld [vmem:[#allocation7 + $0xca8] sm:$0xff]
    %v563 = vld [vmem:[#allocation7 + $0xcb0] sm:$0xff]
    %v564 = vld [vmem:[#allocation7 + $0xcb8] sm:$0xff]
    %v565 = vld [vmem:[#allocation7 + $0xcc0] sm:$0xff]
    %v566 = vld [vmem:[#allocation7 + $0xcc8] sm:$0xff]
    %v567 = vld [vmem:[#allocation7 + $0xcd0] sm:$0xff]
    %v568 = vld [vmem:[#allocation7 + $0xcd8] sm:$0xff]
    %v569 = vld [vmem:[#allocation7 + $0xce0] sm:$0xff]
    %v570 = vld [vmem:[#allocation7 + $0xce8] sm:$0xff]
    %v571 = vld [vmem:[#allocation7 + $0xcf0] sm:$0xff]
    %v572 = vld [vmem:[#allocation7 + $0xcf8] sm:$0xff]
    %v573 = vld [vmem:[#allocation7 + $0xd00] sm:$0xff]
    %v574 = vld [vmem:[#allocation7 + $0xd08] sm:$0xff]
    %v575 = vld [vmem:[#allocation7 + $0xd10] sm:$0xff]
    %v576 = vld [vmem:[#allocation7 + $0xd18] sm:$0xff]
    %v577 = vld [vmem:[#allocation7 + $0xd20] sm:$0xff]
    %v578 = vld [vmem:[#allocation7 + $0xd28] sm:$0xff]
    %v579 = vld [vmem:[#allocation7 + $0xd30] sm:$0xff]
    %v580 = vld [vmem:[#allocation7 + $0xd38] sm:$0xff]
    %v581 = vld [vmem:[#allocation7 + $0xd40] sm:$0xff]
    %v582 = vld [vmem:[#allocation7 + $0xd48] sm:$0xff]
    %v583 = vld [vmem:[#allocation7 + $0xd50] sm:$0xff]
    %v584 = vld [vmem:[#allocation7 + $0xd58] sm:$0xff]
    %v585 = vld [vmem:[#allocation7 + $0xd60] sm:$0xff]
    %v586 = vld [vmem:[#allocation7 + $0xd68] sm:$0xff]
    %v587 = vld [vmem:[#allocation7 + $0xd70] sm:$0xff]
    %v588 = vld [vmem:[#allocation7 + $0xd78] sm:$0xff]
    %v589 = vld [vmem:[#allocation7 + $0xd80] sm:$0xff]
    %v590 = vld [vmem:[#allocation7 + $0xd88] sm:$0xff]
    %v591 = vld [vmem:[#allocation7 + $0xd90] sm:$0xff]
    %v592 = vld [vmem:[#allocation7 + $0xd98] sm:$0xff]
    %v593 = vld [vmem:[#allocation7 + $0xda0] sm:$0xff]
    %v594 = vld [vmem:[#allocation7 + $0xda8] sm:$0xff]
    %v595 = vld [vmem:[#allocation7 + $0xdb0] sm:$0xff]
    %v596 = vld [vmem:[#allocation7 + $0xdb8] sm:$0xff]
    %v597 = vld [vmem:[#allocation7 + $0xdc0] sm:$0xff]
    %v598 = vld [vmem:[#allocation7 + $0xdc8] sm:$0xff]
    %v599 = vld [vmem:[#allocation7 + $0xdd0] sm:$0xff]
    %v600 = vld [vmem:[#allocation7 + $0xdd8] sm:$0xff]
    %v601 = vld [vmem:[#allocation7 + $0xde0] sm:$0xff]
    %v602 = vld [vmem:[#allocation7 + $0xde8] sm:$0xff]
    %v603 = vld [vmem:[#allocation7 + $0xdf0] sm:$0xff]
    %v604 = vld [vmem:[#allocation7 + $0xdf8] sm:$0xff]
    %v605 = vld [vmem:[#allocation7 + $0xe00] sm:$0xff]
    %v606 = vld [vmem:[#allocation7 + $0xe08] sm:$0xff]
    %v607 = vld [vmem:[#allocation7 + $0xe10] sm:$0xff]
    %v608 = vld [vmem:[#allocation7 + $0xe18] sm:$0xff]
    %v609 = vld [vmem:[#allocation7 + $0xe20] sm:$0xff]
    %v610 = vld [vmem:[#allocation7 + $0xe28] sm:$0xff]
    %v611 = vld [vmem:[#allocation7 + $0xe30] sm:$0xff]
    %v612 = vld [vmem:[#allocation7 + $0xe38] sm:$0xff]
    %v613 = vld [vmem:[#allocation7 + $0xe40] sm:$0xff]
    %v614 = vld [vmem:[#allocation7 + $0xe48] sm:$0xff]
    %v615 = vld [vmem:[#allocation7 + $0xe50] sm:$0xff]
    %v616 = vld [vmem:[#allocation7 + $0xe58] sm:$0xff]
    %v617 = vld [vmem:[#allocation7 + $0xe60] sm:$0xff]
    %v618 = vld [vmem:[#allocation7 + $0xe68] sm:$0xff]
    %v619 = vld [vmem:[#allocation7 + $0xe70] sm:$0xff]
    %v620 = vld [vmem:[#allocation7 + $0xe78] sm:$0xff]
    %v621 = vld [vmem:[#allocation7 + $0xe80] sm:$0xff]
    %v622 = vld [vmem:[#allocation7 + $0xe88] sm:$0xff]
    %v623 = vld [vmem:[#allocation7 + $0xe90] sm:$0xff]
    %v624 = vld [vmem:[#allocation7 + $0xe98] sm:$0xff]
    %v625 = vld [vmem:[#allocation7 + $0xea0] sm:$0xff]
    %v626 = vld [vmem:[#allocation7 + $0xea8] sm:$0xff]
    %v627 = vld [vmem:[#allocation7 + $0xeb0] sm:$0xff]
    %v628 = vld [vmem:[#allocation7 + $0xeb8] sm:$0xff]
    %v629 = vld [vmem:[#allocation7 + $0xec0] sm:$0xff]
    %v630 = vld [vmem:[#allocation7 + $0xec8] sm:$0xff]
    %v631 = vld [vmem:[#allocation7 + $0xed0] sm:$0xff]
    %v632 = vld [vmem:[#allocation7 + $0xed8] sm:$0xff]
    %v633 = vld [vmem:[#allocation7 + $0xee0] sm:$0xff]
    %v634 = vld [vmem:[#allocation7 + $0xee8] sm:$0xff]
    %v635 = vld [vmem:[#allocation7 + $0xef0] sm:$0xff]
    %v636 = vld [vmem:[#allocation7 + $0xef8] sm:$0xff]
    %v637 = vld [vmem:[#allocation7 + $0xf00] sm:$0xff]
    %v638 = vld [vmem:[#allocation7 + $0xf08] sm:$0xff]
    %v639 = vld [vmem:[#allocation7 + $0xf10] sm:$0xff]
    %v640 = vld [vmem:[#allocation7 + $0xf18] sm:$0xff]
    %v641 = vld [vmem:[#allocation7 + $0xf20] sm:$0xff]
    %v642 = vld [vmem:[#allocation7 + $0xf28] sm:$0xff]
    %v643 = vld [vmem:[#allocation7 + $0xf30] sm:$0xff]
    %v644 = vld [vmem:[#allocation7 + $0xf38] sm:$0xff]
    %v645 = vld [vmem:[#allocation7 + $0xf40] sm:$0xff]
    %v646 = vld [vmem:[#allocation7 + $0xf48] sm:$0xff]
    %v647 = vld [vmem:[#allocation7 + $0xf50] sm:$0xff]
    %v648 = vld [vmem:[#allocation7 + $0xf58] sm:$0xff]
    %v649 = vld [vmem:[#allocation7 + $0xf60] sm:$0xff]
    %v650 = vld [vmem:[#allocation7 + $0xf68] sm:$0xff]
    %v651 = vld [vmem:[#allocation7 + $0xf70] sm:$0xff]
    %v652 = vld [vmem:[#allocation7 + $0xf78] sm:$0xff]
    %v653 = vld [vmem:[#allocation7 + $0xf80] sm:$0xff]
    %v654 = vld [vmem:[#allocation7 + $0xf88] sm:$0xff]
    %v655 = vld [vmem:[#allocation7 + $0xf90] sm:$0xff]
    %v656 = vld [vmem:[#allocation7 + $0xf98] sm:$0xff]
    %v657 = vld [vmem:[#allocation7 + $0xfa0] sm:$0xff]
    %v658 = vld [vmem:[#allocation7 + $0xfa8] sm:$0xff]
    %v659 = vld [vmem:[#allocation7 + $0xfb0] sm:$0xff]
    %v660 = vld [vmem:[#allocation7 + $0xfb8] sm:$0xff]
    %v661 = vld [vmem:[#allocation7 + $0xfc0] sm:$0xff]
    %v662 = vld [vmem:[#allocation7 + $0xfc8] sm:$0xff]
    %v663 = vld [vmem:[#allocation7 + $0xfd0] sm:$0xff]
    %v664 = vld [vmem:[#allocation7 + $0xfd8] sm:$0xff]
    %v665 = vld [vmem:[#allocation7 + $0xfe0] sm:$0xff]
    %v666 = vld [vmem:[#allocation7 + $0xfe8] sm:$0xff]
    %v667 = vld [vmem:[#allocation7 + $0xff0] sm:$0xff]
    %v668 = vld [vmem:[#allocation7 + $0xff8] sm:$0xff]
    %v669 = vld [vmem:[#allocation8] sm:$0xff]
    %v670 = vld [vmem:[#allocation8 + $0x8] sm:$0xff]
    %v671 = vld [vmem:[#allocation8 + $0x10] sm:$0xff]
    %v672 = vld [vmem:[#allocation8 + $0x18] sm:$0xff]
    %v673 = vld [vmem:[#allocation8 + $0x20] sm:$0xff]
    %v674 = vld [vmem:[#allocation8 + $0x28] sm:$0xff]
    %v675 = vld [vmem:[#allocation8 + $0x30] sm:$0xff]
    %v676 = vld [vmem:[#allocation8 + $0x38] sm:$0xff]
    %v677 = vld [vmem:[#allocation8 + $0x40] sm:$0xff]
    %v678 = vld [vmem:[#allocation8 + $0x48] sm:$0xff]
    %v679 = vld [vmem:[#allocation8 + $0x50] sm:$0xff]
    %v680 = vld [vmem:[#allocation8 + $0x58] sm:$0xff]
    %v681 = vld [vmem:[#allocation8 + $0x60] sm:$0xff]
    %v682 = vld [vmem:[#allocation8 + $0x68] sm:$0xff]
    %v683 = vld [vmem:[#allocation8 + $0x70] sm:$0xff]
    %v684 = vld [vmem:[#allocation8 + $0x78] sm:$0xff]
    %v685 = vld [vmem:[#allocation8 + $0x80] sm:$0xff]
    %v686 = vld [vmem:[#allocation8 + $0x88] sm:$0xff]
    %v687 = vld [vmem:[#allocation8 + $0x90] sm:$0xff]
    %v688 = vld [vmem:[#allocation8 + $0x98] sm:$0xff]
    %v689 = vld [vmem:[#allocation8 + $0xa0] sm:$0xff]
    %v690 = vld [vmem:[#allocation8 + $0xa8] sm:$0xff]
    %v691 = vld [vmem:[#allocation8 + $0xb0] sm:$0xff]
    %v692 = vld [vmem:[#allocation8 + $0xb8] sm:$0xff]
    %v693 = vld [vmem:[#allocation8 + $0xc0] sm:$0xff]
    %v694 = vld [vmem:[#allocation8 + $0xc8] sm:$0xff]
    %v695 = vld [vmem:[#allocation8 + $0xd0] sm:$0xff]
    %v696 = vld [vmem:[#allocation8 + $0xd8] sm:$0xff]
    %v697 = vld [vmem:[#allocation8 + $0xe0] sm:$0xff]
    %v698 = vld [vmem:[#allocation8 + $0xe8] sm:$0xff]
    %v699 = vld [vmem:[#allocation8 + $0xf0] sm:$0xff]
    %v700 = vld [vmem:[#allocation8 + $0xf8] sm:$0xff]
    %v701 = vld [vmem:[#allocation8 + $0x100] sm:$0xff]
    %v702 = vld [vmem:[#allocation8 + $0x108] sm:$0xff]
    %v703 = vld [vmem:[#allocation8 + $0x110] sm:$0xff]
    %v704 = vld [vmem:[#allocation8 + $0x118] sm:$0xff]
    %v705 = vld [vmem:[#allocation8 + $0x120] sm:$0xff]
    %v706 = vld [vmem:[#allocation8 + $0x128] sm:$0xff]
    %v707 = vld [vmem:[#allocation8 + $0x130] sm:$0xff]
    %v708 = vld [vmem:[#allocation8 + $0x138] sm:$0xff]
    %v709 = vld [vmem:[#allocation8 + $0x140] sm:$0xff]
    %v710 = vld [vmem:[#allocation8 + $0x148] sm:$0xff]
    %v711 = vld [vmem:[#allocation8 + $0x150] sm:$0xff]
    %v712 = vld [vmem:[#allocation8 + $0x158] sm:$0xff]
    %v713 = vld [vmem:[#allocation8 + $0x160] sm:$0xff]
    %v714 = vld [vmem:[#allocation8 + $0x168] sm:$0xff]
    %v715 = vld [vmem:[#allocation8 + $0x170] sm:$0xff]
    %v716 = vld [vmem:[#allocation8 + $0x178] sm:$0xff]
    %v717 = vld [vmem:[#allocation8 + $0x180] sm:$0xff]
    %v718 = vld [vmem:[#allocation8 + $0x188] sm:$0xff]
    %v719 = vld [vmem:[#allocation8 + $0x190] sm:$0xff]
    %v720 = vld [vmem:[#allocation8 + $0x198] sm:$0xff]
    %v721 = vld [vmem:[#allocation8 + $0x1a0] sm:$0xff]
    %v722 = vld [vmem:[#allocation8 + $0x1a8] sm:$0xff]
    %v723 = vld [vmem:[#allocation8 + $0x1b0] sm:$0xff]
    %v724 = vld [vmem:[#allocation8 + $0x1b8] sm:$0xff]
    %v725 = vld [vmem:[#allocation8 + $0x1c0] sm:$0xff]
    %v726 = vld [vmem:[#allocation8 + $0x1c8] sm:$0xff]
    %v727 = vld [vmem:[#allocation8 + $0x1d0] sm:$0xff]
    %v728 = vld [vmem:[#allocation8 + $0x1d8] sm:$0xff]
    %v729 = vld [vmem:[#allocation8 + $0x1e0] sm:$0xff]
    %v730 = vld [vmem:[#allocation8 + $0x1e8] sm:$0xff]
    %v731 = vld [vmem:[#allocation8 + $0x1f0] sm:$0xff]
    %v732 = vld [vmem:[#allocation8 + $0x1f8] sm:$0xff]
    %v733 = vld [vmem:[#allocation8 + $0x200] sm:$0xff]
    %v734 = vld [vmem:[#allocation8 + $0x208] sm:$0xff]
    %v735 = vld [vmem:[#allocation8 + $0x210] sm:$0xff]
    %v736 = vld [vmem:[#allocation8 + $0x218] sm:$0xff]
    %v737 = vld [vmem:[#allocation8 + $0x220] sm:$0xff]
    %v738 = vld [vmem:[#allocation8 + $0x228] sm:$0xff]
    %v739 = vld [vmem:[#allocation8 + $0x230] sm:$0xff]
    %v740 = vld [vmem:[#allocation8 + $0x238] sm:$0xff]
    %v741 = vld [vmem:[#allocation8 + $0x240] sm:$0xff]
    %v742 = vld [vmem:[#allocation8 + $0x248] sm:$0xff]
    %v743 = vld [vmem:[#allocation8 + $0x250] sm:$0xff]
    %v744 = vld [vmem:[#allocation8 + $0x258] sm:$0xff]
    %v745 = vld [vmem:[#allocation8 + $0x260] sm:$0xff]
    %v746 = vld [vmem:[#allocation8 + $0x268] sm:$0xff]
    %v747 = vld [vmem:[#allocation8 + $0x270] sm:$0xff]
    %v748 = vld [vmem:[#allocation8 + $0x278] sm:$0xff]
    %v749 = vld [vmem:[#allocation8 + $0x280] sm:$0xff]
    %v750 = vld [vmem:[#allocation8 + $0x288] sm:$0xff]
    %v751 = vld [vmem:[#allocation8 + $0x290] sm:$0xff]
    %v752 = vld [vmem:[#allocation8 + $0x298] sm:$0xff]
    %v753 = vld [vmem:[#allocation8 + $0x2a0] sm:$0xff]
    %v754 = vld [vmem:[#allocation8 + $0x2a8] sm:$0xff]
    %v755 = vld [vmem:[#allocation8 + $0x2b0] sm:$0xff]
    %v756 = vld [vmem:[#allocation8 + $0x2b8] sm:$0xff]
    %v757 = vld [vmem:[#allocation8 + $0x2c0] sm:$0xff]
    %v758 = vld [vmem:[#allocation8 + $0x2c8] sm:$0xff]
    %v759 = vld [vmem:[#allocation8 + $0x2d0] sm:$0xff]
    %v760 = vld [vmem:[#allocation8 + $0x2d8] sm:$0xff]
    %v761 = vld [vmem:[#allocation8 + $0x2e0] sm:$0xff]
    %v762 = vld [vmem:[#allocation8 + $0x2e8] sm:$0xff]
    %v763 = vld [vmem:[#allocation8 + $0x2f0] sm:$0xff]
    %v764 = vld [vmem:[#allocation8 + $0x2f8] sm:$0xff]
    %v765 = vld [vmem:[#allocation8 + $0x300] sm:$0xff]
    %v766 = vld [vmem:[#allocation8 + $0x308] sm:$0xff]
    %v767 = vld [vmem:[#allocation8 + $0x310] sm:$0xff]
    %v768 = vld [vmem:[#allocation8 + $0x318] sm:$0xff]
    %v769 = vld [vmem:[#allocation8 + $0x320] sm:$0xff]
    %v770 = vld [vmem:[#allocation8 + $0x328] sm:$0xff]
    %v771 = vld [vmem:[#allocation8 + $0x330] sm:$0xff]
    %v772 = vld [vmem:[#allocation8 + $0x338] sm:$0xff]
    %v773 = vld [vmem:[#allocation8 + $0x340] sm:$0xff]
    %v774 = vld [vmem:[#allocation8 + $0x348] sm:$0xff]
    %v775 = vld [vmem:[#allocation8 + $0x350] sm:$0xff]
    %v776 = vld [vmem:[#allocation8 + $0x358] sm:$0xff]
    %v777 = vld [vmem:[#allocation8 + $0x360] sm:$0xff]
    %v778 = vld [vmem:[#allocation8 + $0x368] sm:$0xff]
    %v779 = vld [vmem:[#allocation8 + $0x370] sm:$0xff]
    %v780 = vld [vmem:[#allocation8 + $0x378] sm:$0xff]
    %v781 = vld [vmem:[#allocation8 + $0x380] sm:$0xff]
    %v782 = vld [vmem:[#allocation8 + $0x388] sm:$0xff]
    %v783 = vld [vmem:[#allocation8 + $0x390] sm:$0xff]
    %v784 = vld [vmem:[#allocation8 + $0x398] sm:$0xff]
    %v785 = vld [vmem:[#allocation8 + $0x3a0] sm:$0xff]
    %v786 = vld [vmem:[#allocation8 + $0x3a8] sm:$0xff]
    %v787 = vld [vmem:[#allocation8 + $0x3b0] sm:$0xff]
    %v788 = vld [vmem:[#allocation8 + $0x3b8] sm:$0xff]
    %v789 = vld [vmem:[#allocation8 + $0x3c0] sm:$0xff]
    %v790 = vld [vmem:[#allocation8 + $0x3c8] sm:$0xff]
    %v791 = vld [vmem:[#allocation8 + $0x3d0] sm:$0xff]
    %v792 = vld [vmem:[#allocation8 + $0x3d8] sm:$0xff]
    %v793 = vld [vmem:[#allocation8 + $0x3e0] sm:$0xff]
    %v794 = vld [vmem:[#allocation8 + $0x3e8] sm:$0xff]
    %v795 = vld [vmem:[#allocation8 + $0x3f0] sm:$0xff]
    %v796 = vld [vmem:[#allocation8 + $0x3f8] sm:$0xff]
    %v797 = vld [vmem:[#allocation8 + $0x400] sm:$0xff]
    %v798 = vld [vmem:[#allocation8 + $0x408] sm:$0xff]
    %v799 = vld [vmem:[#allocation8 + $0x410] sm:$0xff]
    %v800 = vld [vmem:[#allocation8 + $0x418] sm:$0xff]
    %v801 = vld [vmem:[#allocation8 + $0x420] sm:$0xff]
    %v802 = vld [vmem:[#allocation8 + $0x428] sm:$0xff]
    %v803 = vld [vmem:[#allocation8 + $0x430] sm:$0xff]
    %v804 = vld [vmem:[#allocation8 + $0x438] sm:$0xff]
    %v805 = vld [vmem:[#allocation8 + $0x440] sm:$0xff]
    %v806 = vld [vmem:[#allocation8 + $0x448] sm:$0xff]
    %v807 = vld [vmem:[#allocation8 + $0x450] sm:$0xff]
    %v808 = vld [vmem:[#allocation8 + $0x458] sm:$0xff]
    %v809 = vld [vmem:[#allocation8 + $0x460] sm:$0xff]
    %v810 = vld [vmem:[#allocation8 + $0x468] sm:$0xff]
    %v811 = vld [vmem:[#allocation8 + $0x470] sm:$0xff]
    %v812 = vld [vmem:[#allocation8 + $0x478] sm:$0xff]
    %v813 = vld [vmem:[#allocation8 + $0x480] sm:$0xff]
    %v814 = vld [vmem:[#allocation8 + $0x488] sm:$0xff]
    %v815 = vld [vmem:[#allocation8 + $0x490] sm:$0xff]
    %v816 = vld [vmem:[#allocation8 + $0x498] sm:$0xff]
    %v817 = vld [vmem:[#allocation8 + $0x4a0] sm:$0xff]
    %v818 = vld [vmem:[#allocation8 + $0x4a8] sm:$0xff]
    %v819 = vld [vmem:[#allocation8 + $0x4b0] sm:$0xff]
    %v820 = vld [vmem:[#allocation8 + $0x4b8] sm:$0xff]
    %v821 = vld [vmem:[#allocation8 + $0x4c0] sm:$0xff]
    %v822 = vld [vmem:[#allocation8 + $0x4c8] sm:$0xff]
    %v823 = vld [vmem:[#allocation8 + $0x4d0] sm:$0xff]
    %v824 = vld [vmem:[#allocation8 + $0x4d8] sm:$0xff]
    %v825 = vld [vmem:[#allocation8 + $0x4e0] sm:$0xff]
    %v826 = vld [vmem:[#allocation8 + $0x4e8] sm:$0xff]
    %v827 = vld [vmem:[#allocation8 + $0x4f0] sm:$0xff]
    %v828 = vld [vmem:[#allocation8 + $0x4f8] sm:$0xff]
    %v829 = vld [vmem:[#allocation8 + $0x500] sm:$0xff]
    %v830 = vld [vmem:[#allocation8 + $0x508] sm:$0xff]
    %v831 = vld [vmem:[#allocation8 + $0x510] sm:$0xff]
    %v832 = vld [vmem:[#allocation8 + $0x518] sm:$0xff]
    %v833 = vld [vmem:[#allocation8 + $0x520] sm:$0xff]
    %v834 = vld [vmem:[#allocation8 + $0x528] sm:$0xff]
    %v835 = vld [vmem:[#allocation8 + $0x530] sm:$0xff]
    %v836 = vld [vmem:[#allocation8 + $0x538] sm:$0xff]
    %v837 = vld [vmem:[#allocation8 + $0x540] sm:$0xff]
    %v838 = vld [vmem:[#allocation8 + $0x548] sm:$0xff]
    %v839 = vld [vmem:[#allocation8 + $0x550] sm:$0xff]
    %v840 = vld [vmem:[#allocation8 + $0x558] sm:$0xff]
    %v841 = vld [vmem:[#allocation8 + $0x560] sm:$0xff]
    %v842 = vld [vmem:[#allocation8 + $0x568] sm:$0xff]
    %v843 = vld [vmem:[#allocation8 + $0x570] sm:$0xff]
    %v844 = vld [vmem:[#allocation8 + $0x578] sm:$0xff]
    %v845 = vld [vmem:[#allocation8 + $0x580] sm:$0xff]
    %v846 = vld [vmem:[#allocation8 + $0x588] sm:$0xff]
    %v847 = vld [vmem:[#allocation8 + $0x590] sm:$0xff]
    %v848 = vld [vmem:[#allocation8 + $0x598] sm:$0xff]
    %v849 = vld [vmem:[#allocation8 + $0x5a0] sm:$0xff]
    %v850 = vld [vmem:[#allocation8 + $0x5a8] sm:$0xff]
    %v851 = vld [vmem:[#allocation8 + $0x5b0] sm:$0xff]
    %v852 = vld [vmem:[#allocation8 + $0x5b8] sm:$0xff]
    %v853 = vld [vmem:[#allocation8 + $0x5c0] sm:$0xff]
    %v854 = vld [vmem:[#allocation8 + $0x5c8] sm:$0xff]
    %v855 = vld [vmem:[#allocation8 + $0x5d0] sm:$0xff]
    %v856 = vld [vmem:[#allocation8 + $0x5d8] sm:$0xff]
    %v857 = vld [vmem:[#allocation8 + $0x5e0] sm:$0xff]
    %v858 = vld [vmem:[#allocation8 + $0x5e8] sm:$0xff]
    %v859 = vld [vmem:[#allocation8 + $0x5f0] sm:$0xff]
    %v860 = vld [vmem:[#allocation8 + $0x5f8] sm:$0xff]
    %v861 = vld [vmem:[#allocation8 + $0x600] sm:$0xff]
    %v862 = vld [vmem:[#allocation8 + $0x608] sm:$0xff]
    %v863 = vld [vmem:[#allocation8 + $0x610] sm:$0xff]
    %v864 = vld [vmem:[#allocation8 + $0x618] sm:$0xff]
    %v865 = vld [vmem:[#allocation8 + $0x620] sm:$0xff]
    %v866 = vld [vmem:[#allocation8 + $0x628] sm:$0xff]
    %v867 = vld [vmem:[#allocation8 + $0x630] sm:$0xff]
    %v868 = vld [vmem:[#allocation8 + $0x638] sm:$0xff]
    %v869 = vld [vmem:[#allocation8 + $0x640] sm:$0xff]
    %v870 = vld [vmem:[#allocation8 + $0x648] sm:$0xff]
    %v871 = vld [vmem:[#allocation8 + $0x650] sm:$0xff]
    %v872 = vld [vmem:[#allocation8 + $0x658] sm:$0xff]
    %v873 = vld [vmem:[#allocation8 + $0x660] sm:$0xff]
    %v874 = vld [vmem:[#allocation8 + $0x668] sm:$0xff]
    %v875 = vld [vmem:[#allocation8 + $0x670] sm:$0xff]
    %v876 = vld [vmem:[#allocation8 + $0x678] sm:$0xff]
    %v877 = vld [vmem:[#allocation8 + $0x680] sm:$0xff]
    %v878 = vld [vmem:[#allocation8 + $0x688] sm:$0xff]
    %v879 = vld [vmem:[#allocation8 + $0x690] sm:$0xff]
    %v880 = vld [vmem:[#allocation8 + $0x698] sm:$0xff]
    %v881 = vld [vmem:[#allocation8 + $0x6a0] sm:$0xff]
    %v882 = vld [vmem:[#allocation8 + $0x6a8] sm:$0xff]
    %v883 = vld [vmem:[#allocation8 + $0x6b0] sm:$0xff]
    %v884 = vld [vmem:[#allocation8 + $0x6b8] sm:$0xff]
    %v885 = vld [vmem:[#allocation8 + $0x6c0] sm:$0xff]
    %v886 = vld [vmem:[#allocation8 + $0x6c8] sm:$0xff]
    %v887 = vld [vmem:[#allocation8 + $0x6d0] sm:$0xff]
    %v888 = vld [vmem:[#allocation8 + $0x6d8] sm:$0xff]
    %v889 = vld [vmem:[#allocation8 + $0x6e0] sm:$0xff]
    %v890 = vld [vmem:[#allocation8 + $0x6e8] sm:$0xff]
    %v891 = vld [vmem:[#allocation8 + $0x6f0] sm:$0xff]
    %v892 = vld [vmem:[#allocation8 + $0x6f8] sm:$0xff]
    %v893 = vld [vmem:[#allocation8 + $0x700] sm:$0xff]
    %v894 = vld [vmem:[#allocation8 + $0x708] sm:$0xff]
    %v895 = vld [vmem:[#allocation8 + $0x710] sm:$0xff]
    %v896 = vld [vmem:[#allocation8 + $0x718] sm:$0xff]
    %v897 = vld [vmem:[#allocation8 + $0x720] sm:$0xff]
    %v898 = vld [vmem:[#allocation8 + $0x728] sm:$0xff]
    %v899 = vld [vmem:[#allocation8 + $0x730] sm:$0xff]
    %v900 = vld [vmem:[#allocation8 + $0x738] sm:$0xff]
    %v901 = vld [vmem:[#allocation8 + $0x740] sm:$0xff]
    %v902 = vld [vmem:[#allocation8 + $0x748] sm:$0xff]
    %v903 = vld [vmem:[#allocation8 + $0x750] sm:$0xff]
    %v904 = vld [vmem:[#allocation8 + $0x758] sm:$0xff]
    %v905 = vld [vmem:[#allocation8 + $0x760] sm:$0xff]
    %v906 = vld [vmem:[#allocation8 + $0x768] sm:$0xff]
    %v907 = vld [vmem:[#allocation8 + $0x770] sm:$0xff]
    %v908 = vld [vmem:[#allocation8 + $0x778] sm:$0xff]
    %v909 = vld [vmem:[#allocation8 + $0x780] sm:$0xff]
    %v910 = vld [vmem:[#allocation8 + $0x788] sm:$0xff]
    %v911 = vld [vmem:[#allocation8 + $0x790] sm:$0xff]
    %v912 = vld [vmem:[#allocation8 + $0x798] sm:$0xff]
    %v913 = vld [vmem:[#allocation8 + $0x7a0] sm:$0xff]
    %v914 = vld [vmem:[#allocation8 + $0x7a8] sm:$0xff]
    %v915 = vld [vmem:[#allocation8 + $0x7b0] sm:$0xff]
    %v916 = vld [vmem:[#allocation8 + $0x7b8] sm:$0xff]
    %v917 = vld [vmem:[#allocation8 + $0x7c0] sm:$0xff]
    %v918 = vld [vmem:[#allocation8 + $0x7c8] sm:$0xff]
    %v919 = vld [vmem:[#allocation8 + $0x7d0] sm:$0xff]
    %v920 = vld [vmem:[#allocation8 + $0x7d8] sm:$0xff]
    %v921 = vld [vmem:[#allocation8 + $0x7e0] sm:$0xff]
    %v922 = vld [vmem:[#allocation8 + $0x7e8] sm:$0xff]
    %v923 = vld [vmem:[#allocation8 + $0x7f0] sm:$0xff]
    %v924 = vld [vmem:[#allocation8 + $0x7f8] sm:$0xff]
    %v925 = vld [vmem:[#allocation8 + $0x800] sm:$0xff]
    %v926 = vld [vmem:[#allocation8 + $0x808] sm:$0xff]
    %v927 = vld [vmem:[#allocation8 + $0x810] sm:$0xff]
    %v928 = vld [vmem:[#allocation8 + $0x818] sm:$0xff]
    %v929 = vld [vmem:[#allocation8 + $0x820] sm:$0xff]
    %v930 = vld [vmem:[#allocation8 + $0x828] sm:$0xff]
    %v931 = vld [vmem:[#allocation8 + $0x830] sm:$0xff]
    %v932 = vld [vmem:[#allocation8 + $0x838] sm:$0xff]
    %v933 = vld [vmem:[#allocation8 + $0x840] sm:$0xff]
    %v934 = vld [vmem:[#allocation8 + $0x848] sm:$0xff]
    %v935 = vld [vmem:[#allocation8 + $0x850] sm:$0xff]
    %v936 = vld [vmem:[#allocation8 + $0x858] sm:$0xff]
    %v937 = vld [vmem:[#allocation8 + $0x860] sm:$0xff]
    %v938 = vld [vmem:[#allocation8 + $0x868] sm:$0xff]
    %v939 = vld [vmem:[#allocation8 + $0x870] sm:$0xff]
    %v940 = vld [vmem:[#allocation8 + $0x878] sm:$0xff]
    %v941 = vld [vmem:[#allocation8 + $0x880] sm:$0xff]
    %v942 = vld [vmem:[#allocation8 + $0x888] sm:$0xff]
    %v943 = vld [vmem:[#allocation8 + $0x890] sm:$0xff]
    %v944 = vld [vmem:[#allocation8 + $0x898] sm:$0xff]
    %v945 = vld [vmem:[#allocation8 + $0x8a0] sm:$0xff]
    %v946 = vld [vmem:[#allocation8 + $0x8a8] sm:$0xff]
    %v947 = vld [vmem:[#allocation8 + $0x8b0] sm:$0xff]
    %v948 = vld [vmem:[#allocation8 + $0x8b8] sm:$0xff]
    %v949 = vld [vmem:[#allocation8 + $0x8c0] sm:$0xff]
    %v950 = vld [vmem:[#allocation8 + $0x8c8] sm:$0xff]
    %v951 = vld [vmem:[#allocation8 + $0x8d0] sm:$0xff]
    %v952 = vld [vmem:[#allocation8 + $0x8d8] sm:$0xff]
    %v953 = vld [vmem:[#allocation8 + $0x8e0] sm:$0xff]
    %v954 = vld [vmem:[#allocation8 + $0x8e8] sm:$0xff]
    %v955 = vld [vmem:[#allocation8 + $0x8f0] sm:$0xff]
    %v956 = vld [vmem:[#allocation8 + $0x8f8] sm:$0xff]
    %v957 = vld [vmem:[#allocation8 + $0x900] sm:$0xff]
    %v958 = vld [vmem:[#allocation8 + $0x908] sm:$0xff]
    %v959 = vld [vmem:[#allocation8 + $0x910] sm:$0xff]
    %v960 = vld [vmem:[#allocation8 + $0x918] sm:$0xff]
    %v961 = vld [vmem:[#allocation8 + $0x920] sm:$0xff]
    %v962 = vld [vmem:[#allocation8 + $0x928] sm:$0xff]
    %v963 = vld [vmem:[#allocation8 + $0x930] sm:$0xff]
    %v964 = vld [vmem:[#allocation8 + $0x938] sm:$0xff]
    %v965 = vld [vmem:[#allocation8 + $0x940] sm:$0xff]
    %v966 = vld [vmem:[#allocation8 + $0x948] sm:$0xff]
    %v967 = vld [vmem:[#allocation8 + $0x950] sm:$0xff]
    %v968 = vld [vmem:[#allocation8 + $0x958] sm:$0xff]
    %v969 = vld [vmem:[#allocation8 + $0x960] sm:$0xff]
    %v970 = vld [vmem:[#allocation8 + $0x968] sm:$0xff]
    %v971 = vld [vmem:[#allocation8 + $0x970] sm:$0xff]
    %v972 = vld [vmem:[#allocation8 + $0x978] sm:$0xff]
    %v973 = vld [vmem:[#allocation8 + $0x980] sm:$0xff]
    %v974 = vld [vmem:[#allocation8 + $0x988] sm:$0xff]
    %v975 = vld [vmem:[#allocation8 + $0x990] sm:$0xff]
    %v976 = vld [vmem:[#allocation8 + $0x998] sm:$0xff]
    %v977 = vld [vmem:[#allocation8 + $0x9a0] sm:$0xff]
    %v978 = vld [vmem:[#allocation8 + $0x9a8] sm:$0xff]
    %v979 = vld [vmem:[#allocation8 + $0x9b0] sm:$0xff]
    %v980 = vld [vmem:[#allocation8 + $0x9b8] sm:$0xff]
    %v981 = vld [vmem:[#allocation8 + $0x9c0] sm:$0xff]
    %v982 = vld [vmem:[#allocation8 + $0x9c8] sm:$0xff]
    %v983 = vld [vmem:[#allocation8 + $0x9d0] sm:$0xff]
    %v984 = vld [vmem:[#allocation8 + $0x9d8] sm:$0xff]
    %v985 = vld [vmem:[#allocation8 + $0x9e0] sm:$0xff]
    %v986 = vld [vmem:[#allocation8 + $0x9e8] sm:$0xff]
    %v987 = vld [vmem:[#allocation8 + $0x9f0] sm:$0xff]
    %v988 = vld [vmem:[#allocation8 + $0x9f8] sm:$0xff]
    %v989 = vld [vmem:[#allocation8 + $0xa00] sm:$0xff]
    %v990 = vld [vmem:[#allocation8 + $0xa08] sm:$0xff]
    %v991 = vld [vmem:[#allocation8 + $0xa10] sm:$0xff]
    %v992 = vld [vmem:[#allocation8 + $0xa18] sm:$0xff]
    %v993 = vld [vmem:[#allocation8 + $0xa20] sm:$0xff]
    %v994 = vld [vmem:[#allocation8 + $0xa28] sm:$0xff]
    %v995 = vld [vmem:[#allocation8 + $0xa30] sm:$0xff]
    %v996 = vld [vmem:[#allocation8 + $0xa38] sm:$0xff]
    %v997 = vld [vmem:[#allocation8 + $0xa40] sm:$0xff]
    %v998 = vld [vmem:[#allocation8 + $0xa48] sm:$0xff]
    %v999 = vld [vmem:[#allocation8 + $0xa50] sm:$0xff]
    %v1000 = vld [vmem:[#allocation8 + $0xa58] sm:$0xff]
    %v1001 = vld [vmem:[#allocation8 + $0xa60] sm:$0xff]
    %v1002 = vld [vmem:[#allocation8 + $0xa68] sm:$0xff]
    %v1003 = vld [vmem:[#allocation8 + $0xa70] sm:$0xff]
    %v1004 = vld [vmem:[#allocation8 + $0xa78] sm:$0xff]
    %v1005 = vld [vmem:[#allocation8 + $0xa80] sm:$0xff]
    %v1006 = vld [vmem:[#allocation8 + $0xa88] sm:$0xff]
    %v1007 = vld [vmem:[#allocation8 + $0xa90] sm:$0xff]
    %v1008 = vld [vmem:[#allocation8 + $0xa98] sm:$0xff]
    %v1009 = vld [vmem:[#allocation8 + $0xaa0] sm:$0xff]
    %v1010 = vld [vmem:[#allocation8 + $0xaa8] sm:$0xff]
    %v1011 = vld [vmem:[#allocation8 + $0xab0] sm:$0xff]
    %v1012 = vld [vmem:[#allocation8 + $0xab8] sm:$0xff]
    %v1013 = vld [vmem:[#allocation8 + $0xac0] sm:$0xff]
    %v1014 = vld [vmem:[#allocation8 + $0xac8] sm:$0xff]
    %v1015 = vld [vmem:[#allocation8 + $0xad0] sm:$0xff]
    %v1016 = vld [vmem:[#allocation8 + $0xad8] sm:$0xff]
    %v1017 = vld [vmem:[#allocation8 + $0xae0] sm:$0xff]
    %v1018 = vld [vmem:[#allocation8 + $0xae8] sm:$0xff]
    %v1019 = vld [vmem:[#allocation8 + $0xaf0] sm:$0xff]
    %v1020 = vld [vmem:[#allocation8 + $0xaf8] sm:$0xff]
    %v1021 = vld [vmem:[#allocation8 + $0xb00] sm:$0xff]
    %v1022 = vld [vmem:[#allocation8 + $0xb08] sm:$0xff]
    %v1023 = vld [vmem:[#allocation8 + $0xb10] sm:$0xff]
    %v1024 = vld [vmem:[#allocation8 + $0xb18] sm:$0xff]
    %v1025 = vld [vmem:[#allocation8 + $0xb20] sm:$0xff]
    %v1026 = vld [vmem:[#allocation8 + $0xb28] sm:$0xff]
    %v1027 = vld [vmem:[#allocation8 + $0xb30] sm:$0xff]
    %v1028 = vld [vmem:[#allocation8 + $0xb38] sm:$0xff]
    %v1029 = vld [vmem:[#allocation8 + $0xb40] sm:$0xff]
    %v1030 = vld [vmem:[#allocation8 + $0xb48] sm:$0xff]
    %v1031 = vld [vmem:[#allocation8 + $0xb50] sm:$0xff]
    %v1032 = vld [vmem:[#allocation8 + $0xb58] sm:$0xff]
    %v1033 = vld [vmem:[#allocation8 + $0xb60] sm:$0xff]
    %v1034 = vld [vmem:[#allocation8 + $0xb68] sm:$0xff]
    %v1035 = vld [vmem:[#allocation8 + $0xb70] sm:$0xff]
    %v1036 = vld [vmem:[#allocation8 + $0xb78] sm:$0xff]
    %v1037 = vld [vmem:[#allocation8 + $0xb80] sm:$0xff]
    %v1038 = vld [vmem:[#allocation8 + $0xb88] sm:$0xff]
    %v1039 = vld [vmem:[#allocation8 + $0xb90] sm:$0xff]
    %v1040 = vld [vmem:[#allocation8 + $0xb98] sm:$0xff]
    %v1041 = vld [vmem:[#allocation8 + $0xba0] sm:$0xff]
    %v1042 = vld [vmem:[#allocation8 + $0xba8] sm:$0xff]
    %v1043 = vld [vmem:[#allocation8 + $0xbb0] sm:$0xff]
    %v1044 = vld [vmem:[#allocation8 + $0xbb8] sm:$0xff]
    %v1045 = vld [vmem:[#allocation8 + $0xbc0] sm:$0xff]
    %v1046 = vld [vmem:[#allocation8 + $0xbc8] sm:$0xff]
    %v1047 = vld [vmem:[#allocation8 + $0xbd0] sm:$0xff]
    %v1048 = vld [vmem:[#allocation8 + $0xbd8] sm:$0xff]
    %v1049 = vld [vmem:[#allocation8 + $0xbe0] sm:$0xff]
    %v1050 = vld [vmem:[#allocation8 + $0xbe8] sm:$0xff]
    %v1051 = vld [vmem:[#allocation8 + $0xbf0] sm:$0xff]
    %v1052 = vld [vmem:[#allocation8 + $0xbf8] sm:$0xff]
    %v1053 = vld [vmem:[#allocation8 + $0xc00] sm:$0xff]
    %v1054 = vld [vmem:[#allocation8 + $0xc08] sm:$0xff]
    %v1055 = vld [vmem:[#allocation8 + $0xc10] sm:$0xff]
    %v1056 = vld [vmem:[#allocation8 + $0xc18] sm:$0xff]
    %v1057 = vld [vmem:[#allocation8 + $0xc20] sm:$0xff]
    %v1058 = vld [vmem:[#allocation8 + $0xc28] sm:$0xff]
    %v1059 = vld [vmem:[#allocation8 + $0xc30] sm:$0xff]
    %v1060 = vld [vmem:[#allocation8 + $0xc38] sm:$0xff]
    %v1061 = vld [vmem:[#allocation8 + $0xc40] sm:$0xff]
    %v1062 = vld [vmem:[#allocation8 + $0xc48] sm:$0xff]
    %v1063 = vld [vmem:[#allocation8 + $0xc50] sm:$0xff]
    %v1064 = vld [vmem:[#allocation8 + $0xc58] sm:$0xff]
    %v1065 = vld [vmem:[#allocation8 + $0xc60] sm:$0xff]
    %v1066 = vld [vmem:[#allocation8 + $0xc68] sm:$0xff]
    %v1067 = vld [vmem:[#allocation8 + $0xc70] sm:$0xff]
    %v1068 = vld [vmem:[#allocation8 + $0xc78] sm:$0xff]
    %v1069 = vld [vmem:[#allocation8 + $0xc80] sm:$0xff]
    %v1070 = vld [vmem:[#allocation8 + $0xc88] sm:$0xff]
    %v1071 = vld [vmem:[#allocation8 + $0xc90] sm:$0xff]
    %v1072 = vld [vmem:[#allocation8 + $0xc98] sm:$0xff]
    %v1073 = vld [vmem:[#allocation8 + $0xca0] sm:$0xff]
    %v1074 = vld [vmem:[#allocation8 + $0xca8] sm:$0xff]
    %v1075 = vld [vmem:[#allocation8 + $0xcb0] sm:$0xff]
    %v1076 = vld [vmem:[#allocation8 + $0xcb8] sm:$0xff]
    %v1077 = vld [vmem:[#allocation8 + $0xcc0] sm:$0xff]
    %v1078 = vld [vmem:[#allocation8 + $0xcc8] sm:$0xff]
    %v1079 = vld [vmem:[#allocation8 + $0xcd0] sm:$0xff]
    %v1080 = vld [vmem:[#allocation8 + $0xcd8] sm:$0xff]
    %v1081 = vld [vmem:[#allocation8 + $0xce0] sm:$0xff]
    %v1082 = vld [vmem:[#allocation8 + $0xce8] sm:$0xff]
    %v1083 = vld [vmem:[#allocation8 + $0xcf0] sm:$0xff]
    %v1084 = vld [vmem:[#allocation8 + $0xcf8] sm:$0xff]
    %v1085 = vld [vmem:[#allocation8 + $0xd00] sm:$0xff]
    %v1086 = vld [vmem:[#allocation8 + $0xd08] sm:$0xff]
    %v1087 = vld [vmem:[#allocation8 + $0xd10] sm:$0xff]
    %v1088 = vld [vmem:[#allocation8 + $0xd18] sm:$0xff]
    %v1089 = vld [vmem:[#allocation8 + $0xd20] sm:$0xff]
    %v1090 = vld [vmem:[#allocation8 + $0xd28] sm:$0xff]
    %v1091 = vld [vmem:[#allocation8 + $0xd30] sm:$0xff]
    %v1092 = vld [vmem:[#allocation8 + $0xd38] sm:$0xff]
    %v1093 = vld [vmem:[#allocation8 + $0xd40] sm:$0xff]
    %v1094 = vld [vmem:[#allocation8 + $0xd48] sm:$0xff]
    %v1095 = vld [vmem:[#allocation8 + $0xd50] sm:$0xff]
    %v1096 = vld [vmem:[#allocation8 + $0xd58] sm:$0xff]
    %v1097 = vld [vmem:[#allocation8 + $0xd60] sm:$0xff]
    %v1098 = vld [vmem:[#allocation8 + $0xd68] sm:$0xff]
    %v1099 = vld [vmem:[#allocation8 + $0xd70] sm:$0xff]
    %v1100 = vld [vmem:[#allocation8 + $0xd78] sm:$0xff]
    %v1101 = vld [vmem:[#allocation8 + $0xd80] sm:$0xff]
    %v1102 = vld [vmem:[#allocation8 + $0xd88] sm:$0xff]
    %v1103 = vld [vmem:[#allocation8 + $0xd90] sm:$0xff]
    %v1104 = vld [vmem:[#allocation8 + $0xd98] sm:$0xff]
    %v1105 = vld [vmem:[#allocation8 + $0xda0] sm:$0xff]
    %v1106 = vld [vmem:[#allocation8 + $0xda8] sm:$0xff]
    %v1107 = vld [vmem:[#allocation8 + $0xdb0] sm:$0xff]
    %v1108 = vld [vmem:[#allocation8 + $0xdb8] sm:$0xff]
    %v1109 = vld [vmem:[#allocation8 + $0xdc0] sm:$0xff]
    %v1110 = vld [vmem:[#allocation8 + $0xdc8] sm:$0xff]
    %v1111 = vld [vmem:[#allocation8 + $0xdd0] sm:$0xff]
    %v1112 = vld [vmem:[#allocation8 + $0xdd8] sm:$0xff]
    %v1113 = vld [vmem:[#allocation8 + $0xde0] sm:$0xff]
    %v1114 = vld [vmem:[#allocation8 + $0xde8] sm:$0xff]
    %v1115 = vld [vmem:[#allocation8 + $0xdf0] sm:$0xff]
    %v1116 = vld [vmem:[#allocation8 + $0xdf8] sm:$0xff]
    %v1117 = vld [vmem:[#allocation8 + $0xe00] sm:$0xff]
    %v1118 = vld [vmem:[#allocation8 + $0xe08] sm:$0xff]
    %v1119 = vld [vmem:[#allocation8 + $0xe10] sm:$0xff]
    %v1120 = vld [vmem:[#allocation8 + $0xe18] sm:$0xff]
    %v1121 = vld [vmem:[#allocation8 + $0xe20] sm:$0xff]
    %v1122 = vld [vmem:[#allocation8 + $0xe28] sm:$0xff]
    %v1123 = vld [vmem:[#allocation8 + $0xe30] sm:$0xff]
    %v1124 = vld [vmem:[#allocation8 + $0xe38] sm:$0xff]
    %v1125 = vld [vmem:[#allocation8 + $0xe40] sm:$0xff]
    %v1126 = vld [vmem:[#allocation8 + $0xe48] sm:$0xff]
    %v1127 = vld [vmem:[#allocation8 + $0xe50] sm:$0xff]
    %v1128 = vld [vmem:[#allocation8 + $0xe58] sm:$0xff]
    %v1129 = vld [vmem:[#allocation8 + $0xe60] sm:$0xff]
    %v1130 = vld [vmem:[#allocation8 + $0xe68] sm:$0xff]
    %v1131 = vld [vmem:[#allocation8 + $0xe70] sm:$0xff]
    %v1132 = vld [vmem:[#allocation8 + $0xe78] sm:$0xff]
    %v1133 = vld [vmem:[#allocation8 + $0xe80] sm:$0xff]
    %v1134 = vld [vmem:[#allocation8 + $0xe88] sm:$0xff]
    %v1135 = vld [vmem:[#allocation8 + $0xe90] sm:$0xff]
    %v1136 = vld [vmem:[#allocation8 + $0xe98] sm:$0xff]
    %v1137 = vld [vmem:[#allocation8 + $0xea0] sm:$0xff]
    %v1138 = vld [vmem:[#allocation8 + $0xea8] sm:$0xff]
    %v1139 = vld [vmem:[#allocation8 + $0xeb0] sm:$0xff]
    %v1140 = vld [vmem:[#allocation8 + $0xeb8] sm:$0xff]
    %v1141 = vld [vmem:[#allocation8 + $0xec0] sm:$0xff]
    %v1142 = vld [vmem:[#allocation8 + $0xec8] sm:$0xff]
    %v1143 = vld [vmem:[#allocation8 + $0xed0] sm:$0xff]
    %v1144 = vld [vmem:[#allocation8 + $0xed8] sm:$0xff]
    %v1145 = vld [vmem:[#allocation8 + $0xee0] sm:$0xff]
    %v1146 = vld [vmem:[#allocation8 + $0xee8] sm:$0xff]
    %v1147 = vld [vmem:[#allocation8 + $0xef0] sm:$0xff]
    %v1148 = vld [vmem:[#allocation8 + $0xef8] sm:$0xff]
    %v1149 = vld [vmem:[#allocation8 + $0xf00] sm:$0xff]
    %v1150 = vld [vmem:[#allocation8 + $0xf08] sm:$0xff]
    %v1151 = vld [vmem:[#allocation8 + $0xf10] sm:$0xff]
    %v1152 = vld [vmem:[#allocation8 + $0xf18] sm:$0xff]
    %v1153 = vld [vmem:[#allocation8 + $0xf20] sm:$0xff]
    %v1154 = vld [vmem:[#allocation8 + $0xf28] sm:$0xff]
    %v1155 = vld [vmem:[#allocation8 + $0xf30] sm:$0xff]
    %v1156 = vld [vmem:[#allocation8 + $0xf38] sm:$0xff]
    %v1157 = vld [vmem:[#allocation8 + $0xf40] sm:$0xff]
    %v1158 = vld [vmem:[#allocation8 + $0xf48] sm:$0xff]
    %v1159 = vld [vmem:[#allocation8 + $0xf50] sm:$0xff]
    %v1160 = vld [vmem:[#allocation8 + $0xf58] sm:$0xff]
    %v1161 = vld [vmem:[#allocation8 + $0xf60] sm:$0xff]
    %v1162 = vld [vmem:[#allocation8 + $0xf68] sm:$0xff]
    %v1163 = vld [vmem:[#allocation8 + $0xf70] sm:$0xff]
    %v1164 = vld [vmem:[#allocation8 + $0xf78] sm:$0xff]
    %v1165 = vld [vmem:[#allocation8 + $0xf80] sm:$0xff]
    %v1166 = vld [vmem:[#allocation8 + $0xf88] sm:$0xff]
    %v1167 = vld [vmem:[#allocation8 + $0xf90] sm:$0xff]
    %v1168 = vld [vmem:[#allocation8 + $0xf98] sm:$0xff]
    %v1169 = vld [vmem:[#allocation8 + $0xfa0] sm:$0xff]
    %v1170 = vld [vmem:[#allocation8 + $0xfa8] sm:$0xff]
    %v1171 = vld [vmem:[#allocation8 + $0xfb0] sm:$0xff]
    %v1172 = vld [vmem:[#allocation8 + $0xfb8] sm:$0xff]
    %v1173 = vld [vmem:[#allocation8 + $0xfc0] sm:$0xff]
    %v1174 = vld [vmem:[#allocation8 + $0xfc8] sm:$0xff]
    %v1175 = vld [vmem:[#allocation8 + $0xfd0] sm:$0xff]
    %v1176 = vld [vmem:[#allocation8 + $0xfd8] sm:$0xff]
    %v1177 = vld [vmem:[#allocation8 + $0xfe0] sm:$0xff]
    %v1178 = vld [vmem:[#allocation8 + $0xfe8] sm:$0xff]
    %v1179 = vld [vmem:[#allocation8 + $0xff0] sm:$0xff]
    %v1180 = vld [vmem:[#allocation8 + $0xff8] sm:$0xff]
    %1181 = vmatpush.msra.mxu0 %v684
    %1182 = vmatpush.msra.mxu0 %v683
    %1183 = vmatpush.msra.mxu0 %v682
    %1184 = vmatpush.msra.mxu0 %v681
    %1185 = vmatpush.msra.mxu0 %v680
    %1186 = vmatpush.msra.mxu0 %v679
    %1187 = vmatpush.msra.mxu0 %v678
    %1188 = vmatpush.msra.mxu0 %v677
    %1189 = vmatpush.msra.mxu0 %v676
    %1190 = vmatpush.msra.mxu0 %v675
    %1191 = vmatpush.msra.mxu0 %v674
    %1192 = vmatpush.msra.mxu0 %v673
    %1193 = vmatpush.msra.mxu0 %v672
    %1194 = vmatpush.msra.mxu0 %v671
    %1195 = vmatpush.msra.mxu0 %v670
    %1196 = vmatpush.msra.mxu0 %v669
    %1197 = vmatmul.f32.gmra.mxu0 %v125
    %v1198 = vpop.f32.mrf.mxu0
    %v1199 = vadd.f32 0.0, %v1198
    %1200 = vdwg.mxu0
    %1201 = vmatpush.msra.mxu0 %v700
    %1202 = vmatpush.msra.mxu0 %v699
    %1203 = vmatpush.msra.mxu0 %v698
    %1204 = vmatpush.msra.mxu0 %v697
    %1205 = vmatpush.msra.mxu0 %v696
    %1206 = vmatpush.msra.mxu0 %v695
    %1207 = vmatpush.msra.mxu0 %v694
    %1208 = vmatpush.msra.mxu0 %v693
    %1209 = vmatpush.msra.mxu0 %v692
    %1210 = vmatpush.msra.mxu0 %v691
    %1211 = vmatpush.msra.mxu0 %v690
    %1212 = vmatpush.msra.mxu0 %v689
    %1213 = vmatpush.msra.mxu0 %v688
    %1214 = vmatpush.msra.mxu0 %v687
    %1215 = vmatpush.msra.mxu0 %v686
    %1216 = vmatpush.msra.mxu0 %v685
    %1217 = vmatmul.f32.gmra.mxu0 %v126
    %v1218 = vpop.f32.mrf.mxu0
    %v1219 = vadd.f32 %v1199, %v1218
    %1220 = vdwg.mxu0
    %1221 = vmatpush.msra.mxu0 %v716
    %1222 = vmatpush.msra.mxu0 %v715
    %1223 = vmatpush.msra.mxu0 %v714
    %1224 = vmatpush.msra.mxu0 %v713
    %1225 = vmatpush.msra.mxu0 %v712
    %1226 = vmatpush.msra.mxu0 %v711
    %1227 = vmatpush.msra.mxu0 %v710
    %1228 = vmatpush.msra.mxu0 %v709
    %1229 = vmatpush.msra.mxu0 %v708
    %1230 = vmatpush.msra.mxu0 %v707
    %1231 = vmatpush.msra.mxu0 %v706
    %1232 = vmatpush.msra.mxu0 %v705
    %1233 = vmatpush.msra.mxu0 %v704
    %1234 = vmatpush.msra.mxu0 %v703
    %1235 = vmatpush.msra.mxu0 %v702
    %1236 = vmatpush.msra.mxu0 %v701
    %1237 = vmatmul.f32.gmra.mxu0 %v127
    %v1238 = vpop.f32.mrf.mxu0
    %v1239 = vadd.f32 %v1219, %v1238
    %1240 = vdwg.mxu0
    %1241 = vmatpush.msra.mxu0 %v732
    %1242 = vmatpush.msra.mxu0 %v731
    %1243 = vmatpush.msra.mxu0 %v730
    %1244 = vmatpush.msra.mxu0 %v729
    %1245 = vmatpush.msra.mxu0 %v728
    %1246 = vmatpush.msra.mxu0 %v727
    %1247 = vmatpush.msra.mxu0 %v726
    %1248 = vmatpush.msra.mxu0 %v725
    %1249 = vmatpush.msra.mxu0 %v724
    %1250 = vmatpush.msra.mxu0 %v723
    %1251 = vmatpush.msra.mxu0 %v722
    %1252 = vmatpush.msra.mxu0 %v721
    %1253 = vmatpush.msra.mxu0 %v720
    %1254 = vmatpush.msra.mxu0 %v719
    %1255 = vmatpush.msra.mxu0 %v718
    %1256 = vmatpush.msra.mxu0 %v717
    %1257 = vmatmul.f32.gmra.mxu0 %v128
    %v1258 = vpop.f32.mrf.mxu0
    %v1259 = vadd.f32 %v1239, %v1258
    %1260 = vdwg.mxu0
    %1261 = vmatpush.msra.mxu0 %v748
    %1262 = vmatpush.msra.mxu0 %v747
    %1263 = vmatpush.msra.mxu0 %v746
    %1264 = vmatpush.msra.mxu0 %v745
    %1265 = vmatpush.msra.mxu0 %v744
    %1266 = vmatpush.msra.mxu0 %v743
    %1267 = vmatpush.msra.mxu0 %v742
    %1268 = vmatpush.msra.mxu0 %v741
    %1269 = vmatpush.msra.mxu0 %v740
    %1270 = vmatpush.msra.mxu0 %v739
    %1271 = vmatpush.msra.mxu0 %v738
    %1272 = vmatpush.msra.mxu0 %v737
    %1273 = vmatpush.msra.mxu0 %v736
    %1274 = vmatpush.msra.mxu0 %v735
    %1275 = vmatpush.msra.mxu0 %v734
    %1276 = vmatpush.msra.mxu0 %v733
    %1277 = vmatmul.f32.gmra.mxu0 %v129
    %v1278 = vpop.f32.mrf.mxu0
    %v1279 = vadd.f32 %v1259, %v1278
    %1280 = vdwg.mxu0
    %1281 = vmatpush.msra.mxu0 %v764
    %1282 = vmatpush.msra.mxu0 %v763
    %1283 = vmatpush.msra.mxu0 %v762
    %1284 = vmatpush.msra.mxu0 %v761
    %1285 = vmatpush.msra.mxu0 %v760
    %1286 = vmatpush.msra.mxu0 %v759
    %1287 = vmatpush.msra.mxu0 %v758
    %1288 = vmatpush.msra.mxu0 %v757
    %1289 = vmatpush.msra.mxu0 %v756
    %1290 = vmatpush.msra.mxu0 %v755
    %1291 = vmatpush.msra.mxu0 %v754
    %1292 = vmatpush.msra.mxu0 %v753
    %1293 = vmatpush.msra.mxu0 %v752
    %1294 = vmatpush.msra.mxu0 %v751
    %1295 = vmatpush.msra.mxu0 %v750
    %1296 = vmatpush.msra.mxu0 %v749
    %1297 = vmatmul.f32.gmra.mxu0 %v130
    %v1298 = vpop.f32.mrf.mxu0
    %v1299 = vadd.f32 %v1279, %v1298
    %1300 = vdwg.mxu0
    %1301 = vmatpush.msra.mxu0 %v780
    %1302 = vmatpush.msra.mxu0 %v779
    %1303 = vmatpush.msra.mxu0 %v778
    %1304 = vmatpush.msra.mxu0 %v777
    %1305 = vmatpush.msra.mxu0 %v776
    %1306 = vmatpush.msra.mxu0 %v775
    %1307 = vmatpush.msra.mxu0 %v774
    %1308 = vmatpush.msra.mxu0 %v773
    %1309 = vmatpush.msra.mxu0 %v772
    %1310 = vmatpush.msra.mxu0 %v771
    %1311 = vmatpush.msra.mxu0 %v770
    %1312 = vmatpush.msra.mxu0 %v769
    %1313 = vmatpush.msra.mxu0 %v768
    %1314 = vmatpush.msra.mxu0 %v767
    %1315 = vmatpush.msra.mxu0 %v766
    %1316 = vmatpush.msra.mxu0 %v765
    %1317 = vmatmul.f32.gmra.mxu0 %v131
    %v1318 = vpop.f32.mrf.mxu0
    %v1319 = vadd.f32 %v1299, %v1318
    %1320 = vdwg.mxu0
    %1321 = vmatpush.msra.mxu0 %v796
    %1322 = vmatpush.msra.mxu0 %v795
    %1323 = vmatpush.msra.mxu0 %v794
    %1324 = vmatpush.msra.mxu0 %v793
    %1325 = vmatpush.msra.mxu0 %v792
    %1326 = vmatpush.msra.mxu0 %v791
    %1327 = vmatpush.msra.mxu0 %v790
    %1328 = vmatpush.msra.mxu0 %v789
    %1329 = vmatpush.msra.mxu0 %v788
    %1330 = vmatpush.msra.mxu0 %v787
    %1331 = vmatpush.msra.mxu0 %v786
    %1332 = vmatpush.msra.mxu0 %v785
    %1333 = vmatpush.msra.mxu0 %v784
    %1334 = vmatpush.msra.mxu0 %v783
    %1335 = vmatpush.msra.mxu0 %v782
    %1336 = vmatpush.msra.mxu0 %v781
    %1337 = vmatmul.f32.gmra.mxu0 %v132
    %v1338 = vpop.f32.mrf.mxu0
    %v1339 = vadd.f32 %v1319, %v1338
    %1340 = vdwg.mxu0
    %1341 = vmatpush.msra.mxu0 %v812
    %1342 = vmatpush.msra.mxu0 %v811
    %1343 = vmatpush.msra.mxu0 %v810
    %1344 = vmatpush.msra.mxu0 %v809
    %1345 = vmatpush.msra.mxu0 %v808
    %1346 = vmatpush.msra.mxu0 %v807
    %1347 = vmatpush.msra.mxu0 %v806
    %1348 = vmatpush.msra.mxu0 %v805
    %1349 = vmatpush.msra.mxu0 %v804
    %1350 = vmatpush.msra.mxu0 %v803
    %1351 = vmatpush.msra.mxu0 %v802
    %1352 = vmatpush.msra.mxu0 %v801
    %1353 = vmatpush.msra.mxu0 %v800
    %1354 = vmatpush.msra.mxu0 %v799
    %1355 = vmatpush.msra.mxu0 %v798
    %1356 = vmatpush.msra.mxu0 %v797
    %1357 = vmatmul.f32.gmra.mxu0 %v133
    %v1358 = vpop.f32.mrf.mxu0
    %v1359 = vadd.f32 %v1339, %v1358
    %1360 = vdwg.mxu0
    %1361 = vmatpush.msra.mxu0 %v828
    %1362 = vmatpush.msra.mxu0 %v827
    %1363 = vmatpush.msra.mxu0 %v826
    %1364 = vmatpush.msra.mxu0 %v825
    %1365 = vmatpush.msra.mxu0 %v824
    %1366 = vmatpush.msra.mxu0 %v823
    %1367 = vmatpush.msra.mxu0 %v822
    %1368 = vmatpush.msra.mxu0 %v821
    %1369 = vmatpush.msra.mxu0 %v820
    %1370 = vmatpush.msra.mxu0 %v819
    %1371 = vmatpush.msra.mxu0 %v818
    %1372 = vmatpush.msra.mxu0 %v817
    %1373 = vmatpush.msra.mxu0 %v816
    %1374 = vmatpush.msra.mxu0 %v815
    %1375 = vmatpush.msra.mxu0 %v814
    %1376 = vmatpush.msra.mxu0 %v813
    %1377 = vmatmul.f32.gmra.mxu0 %v134
    %v1378 = vpop.f32.mrf.mxu0
    %v1379 = vadd.f32 %v1359, %v1378
    %1380 = vdwg.mxu0
    %1381 = vmatpush.msra.mxu0 %v844
    %1382 = vmatpush.msra.mxu0 %v843
    %1383 = vmatpush.msra.mxu0 %v842
    %1384 = vmatpush.msra.mxu0 %v841
    %1385 = vmatpush.msra.mxu0 %v840
    %1386 = vmatpush.msra.mxu0 %v839
    %1387 = vmatpush.msra.mxu0 %v838
    %1388 = vmatpush.msra.mxu0 %v837
    %1389 = vmatpush.msra.mxu0 %v836
    %1390 = vmatpush.msra.mxu0 %v835
    %1391 = vmatpush.msra.mxu0 %v834
    %1392 = vmatpush.msra.mxu0 %v833
    %1393 = vmatpush.msra.mxu0 %v832
    %1394 = vmatpush.msra.mxu0 %v831
    %1395 = vmatpush.msra.mxu0 %v830
    %1396 = vmatpush.msra.mxu0 %v829
    %1397 = vmatmul.f32.gmra.mxu0 %v135
    %v1398 = vpop.f32.mrf.mxu0
    %v1399 = vadd.f32 %v1379, %v1398
    %1400 = vdwg.mxu0
    %1401 = vmatpush.msra.mxu0 %v860
    %1402 = vmatpush.msra.mxu0 %v859
    %1403 = vmatpush.msra.mxu0 %v858
    %1404 = vmatpush.msra.mxu0 %v857
    %1405 = vmatpush.msra.mxu0 %v856
    %1406 = vmatpush.msra.mxu0 %v855
    %1407 = vmatpush.msra.mxu0 %v854
    %1408 = vmatpush.msra.mxu0 %v853
    %1409 = vmatpush.msra.mxu0 %v852
    %1410 = vmatpush.msra.mxu0 %v851
    %1411 = vmatpush.msra.mxu0 %v850
    %1412 = vmatpush.msra.mxu0 %v849
    %1413 = vmatpush.msra.mxu0 %v848
    %1414 = vmatpush.msra.mxu0 %v847
    %1415 = vmatpush.msra.mxu0 %v846
    %1416 = vmatpush.msra.mxu0 %v845
    %1417 = vmatmul.f32.gmra.mxu0 %v136
    %v1418 = vpop.f32.mrf.mxu0
    %v1419 = vadd.f32 %v1399, %v1418
    %1420 = vdwg.mxu0
    %1421 = vmatpush.msra.mxu0 %v876
    %1422 = vmatpush.msra.mxu0 %v875
    %1423 = vmatpush.msra.mxu0 %v874
    %1424 = vmatpush.msra.mxu0 %v873
    %1425 = vmatpush.msra.mxu0 %v872
    %1426 = vmatpush.msra.mxu0 %v871
    %1427 = vmatpush.msra.mxu0 %v870
    %1428 = vmatpush.msra.mxu0 %v869
    %1429 = vmatpush.msra.mxu0 %v868
    %1430 = vmatpush.msra.mxu0 %v867
    %1431 = vmatpush.msra.mxu0 %v866
    %1432 = vmatpush.msra.mxu0 %v865
    %1433 = vmatpush.msra.mxu0 %v864
    %1434 = vmatpush.msra.mxu0 %v863
    %1435 = vmatpush.msra.mxu0 %v862
    %1436 = vmatpush.msra.mxu0 %v861
    %1437 = vmatmul.f32.gmra.mxu0 %v137
    %v1438 = vpop.f32.mrf.mxu0
    %v1439 = vadd.f32 %v1419, %v1438
    %1440 = vdwg.mxu0
    %1441 = vmatpush.msra.mxu0 %v892
    %1442 = vmatpush.msra.mxu0 %v891
    %1443 = vmatpush.msra.mxu0 %v890
    %1444 = vmatpush.msra.mxu0 %v889
    %1445 = vmatpush.msra.mxu0 %v888
    %1446 = vmatpush.msra.mxu0 %v887
    %1447 = vmatpush.msra.mxu0 %v886
    %1448 = vmatpush.msra.mxu0 %v885
    %1449 = vmatpush.msra.mxu0 %v884
    %1450 = vmatpush.msra.mxu0 %v883
    %1451 = vmatpush.msra.mxu0 %v882
    %1452 = vmatpush.msra.mxu0 %v881
    %1453 = vmatpush.msra.mxu0 %v880
    %1454 = vmatpush.msra.mxu0 %v879
    %1455 = vmatpush.msra.mxu0 %v878
    %1456 = vmatpush.msra.mxu0 %v877
    %1457 = vmatmul.f32.gmra.mxu0 %v138
    %v1458 = vpop.f32.mrf.mxu0
    %v1459 = vadd.f32 %v1439, %v1458
    %1460 = vdwg.mxu0
    %1461 = vmatpush.msra.mxu0 %v908
    %1462 = vmatpush.msra.mxu0 %v907
    %1463 = vmatpush.msra.mxu0 %v906
    %1464 = vmatpush.msra.mxu0 %v905
    %1465 = vmatpush.msra.mxu0 %v904
    %1466 = vmatpush.msra.mxu0 %v903
    %1467 = vmatpush.msra.mxu0 %v902
    %1468 = vmatpush.msra.mxu0 %v901
    %1469 = vmatpush.msra.mxu0 %v900
    %1470 = vmatpush.msra.mxu0 %v899
    %1471 = vmatpush.msra.mxu0 %v898
    %1472 = vmatpush.msra.mxu0 %v897
    %1473 = vmatpush.msra.mxu0 %v896
    %1474 = vmatpush.msra.mxu0 %v895
    %1475 = vmatpush.msra.mxu0 %v894
    %1476 = vmatpush.msra.mxu0 %v893
    %1477 = vmatmul.f32.gmra.mxu0 %v139
    %v1478 = vpop.f32.mrf.mxu0
    %v1479 = vadd.f32 %v1459, %v1478
    %1480 = vdwg.mxu0
    %1481 = vmatpush.msra.mxu0 %v924
    %1482 = vmatpush.msra.mxu0 %v923
    %1483 = vmatpush.msra.mxu0 %v922
    %1484 = vmatpush.msra.mxu0 %v921
    %1485 = vmatpush.msra.mxu0 %v920
    %1486 = vmatpush.msra.mxu0 %v919
    %1487 = vmatpush.msra.mxu0 %v918
    %1488 = vmatpush.msra.mxu0 %v917
    %1489 = vmatpush.msra.mxu0 %v916
    %1490 = vmatpush.msra.mxu0 %v915
    %1491 = vmatpush.msra.mxu0 %v914
    %1492 = vmatpush.msra.mxu0 %v913
    %1493 = vmatpush.msra.mxu0 %v912
    %1494 = vmatpush.msra.mxu0 %v911
    %1495 = vmatpush.msra.mxu0 %v910
    %1496 = vmatpush.msra.mxu0 %v909
    %1497 = vmatmul.f32.gmra.mxu0 %v140
    %v1498 = vpop.f32.mrf.mxu0
    %v1499 = vadd.f32 %v1479, %v1498
    %1500 = vdwg.mxu0
    %1501 = vmatpush.msra.mxu0 %v940
    %1502 = vmatpush.msra.mxu0 %v939
    %1503 = vmatpush.msra.mxu0 %v938
    %1504 = vmatpush.msra.mxu0 %v937
    %1505 = vmatpush.msra.mxu0 %v936
    %1506 = vmatpush.msra.mxu0 %v935
    %1507 = vmatpush.msra.mxu0 %v934
    %1508 = vmatpush.msra.mxu0 %v933
    %1509 = vmatpush.msra.mxu0 %v932
    %1510 = vmatpush.msra.mxu0 %v931
    %1511 = vmatpush.msra.mxu0 %v930
    %1512 = vmatpush.msra.mxu0 %v929
    %1513 = vmatpush.msra.mxu0 %v928
    %1514 = vmatpush.msra.mxu0 %v927
    %1515 = vmatpush.msra.mxu0 %v926
    %1516 = vmatpush.msra.mxu0 %v925
    %1517 = vmatmul.f32.gmra.mxu0 %v141
    %v1518 = vpop.f32.mrf.mxu0
    %v1519 = vadd.f32 %v1499, %v1518
    %1520 = vdwg.mxu0
    %1521 = vmatpush.msra.mxu0 %v956
    %1522 = vmatpush.msra.mxu0 %v955
    %1523 = vmatpush.msra.mxu0 %v954
    %1524 = vmatpush.msra.mxu0 %v953
    %1525 = vmatpush.msra.mxu0 %v952
    %1526 = vmatpush.msra.mxu0 %v951
    %1527 = vmatpush.msra.mxu0 %v950
    %1528 = vmatpush.msra.mxu0 %v949
    %1529 = vmatpush.msra.mxu0 %v948
    %1530 = vmatpush.msra.mxu0 %v947
    %1531 = vmatpush.msra.mxu0 %v946
    %1532 = vmatpush.msra.mxu0 %v945
    %1533 = vmatpush.msra.mxu0 %v944
    %1534 = vmatpush.msra.mxu0 %v943
    %1535 = vmatpush.msra.mxu0 %v942
    %1536 = vmatpush.msra.mxu0 %v941
    %1537 = vmatmul.f32.gmra.mxu0 %v142
    %v1538 = vpop.f32.mrf.mxu0
    %v1539 = vadd.f32 %v1519, %v1538
    %1540 = vdwg.mxu0
    %1541 = vmatpush.msra.mxu0 %v972
    %1542 = vmatpush.msra.mxu0 %v971
    %1543 = vmatpush.msra.mxu0 %v970
    %1544 = vmatpush.msra.mxu0 %v969
    %1545 = vmatpush.msra.mxu0 %v968
    %1546 = vmatpush.msra.mxu0 %v967
    %1547 = vmatpush.msra.mxu0 %v966
    %1548 = vmatpush.msra.mxu0 %v965
    %1549 = vmatpush.msra.mxu0 %v964
    %1550 = vmatpush.msra.mxu0 %v963
    %1551 = vmatpush.msra.mxu0 %v962
    %1552 = vmatpush.msra.mxu0 %v961
    %1553 = vmatpush.msra.mxu0 %v960
    %1554 = vmatpush.msra.mxu0 %v959
    %1555 = vmatpush.msra.mxu0 %v958
    %1556 = vmatpush.msra.mxu0 %v957
    %1557 = vmatmul.f32.gmra.mxu0 %v143
    %v1558 = vpop.f32.mrf.mxu0
    %v1559 = vadd.f32 %v1539, %v1558
    %1560 = vdwg.mxu0
    %1561 = vmatpush.msra.mxu0 %v988
    %1562 = vmatpush.msra.mxu0 %v987
    %1563 = vmatpush.msra.mxu0 %v986
    %1564 = vmatpush.msra.mxu0 %v985
    %1565 = vmatpush.msra.mxu0 %v984
    %1566 = vmatpush.msra.mxu0 %v983
    %1567 = vmatpush.msra.mxu0 %v982
    %1568 = vmatpush.msra.mxu0 %v981
    %1569 = vmatpush.msra.mxu0 %v980
    %1570 = vmatpush.msra.mxu0 %v979
    %1571 = vmatpush.msra.mxu0 %v978
    %1572 = vmatpush.msra.mxu0 %v977
    %1573 = vmatpush.msra.mxu0 %v976
    %1574 = vmatpush.msra.mxu0 %v975
    %1575 = vmatpush.msra.mxu0 %v974
    %1576 = vmatpush.msra.mxu0 %v973
    %1577 = vmatmul.f32.gmra.mxu0 %v144
    %v1578 = vpop.f32.mrf.mxu0
    %v1579 = vadd.f32 %v1559, %v1578
    %1580 = vdwg.mxu0
    %1581 = vmatpush.msra.mxu0 %v1004
    %1582 = vmatpush.msra.mxu0 %v1003
    %1583 = vmatpush.msra.mxu0 %v1002
    %1584 = vmatpush.msra.mxu0 %v1001
    %1585 = vmatpush.msra.mxu0 %v1000
    %1586 = vmatpush.msra.mxu0 %v999
    %1587 = vmatpush.msra.mxu0 %v998
    %1588 = vmatpush.msra.mxu0 %v997
    %1589 = vmatpush.msra.mxu0 %v996
    %1590 = vmatpush.msra.mxu0 %v995
    %1591 = vmatpush.msra.mxu0 %v994
    %1592 = vmatpush.msra.mxu0 %v993
    %1593 = vmatpush.msra.mxu0 %v992
    %1594 = vmatpush.msra.mxu0 %v991
    %1595 = vmatpush.msra.mxu0 %v990
    %1596 = vmatpush.msra.mxu0 %v989
    %1597 = vmatmul.f32.gmra.mxu0 %v145
    %v1598 = vpop.f32.mrf.mxu0
    %v1599 = vadd.f32 %v1579, %v1598
    %1600 = vdwg.mxu0
    %1601 = vmatpush.msra.mxu0 %v1020
    %1602 = vmatpush.msra.mxu0 %v1019
    %1603 = vmatpush.msra.mxu0 %v1018
    %1604 = vmatpush.msra.mxu0 %v1017
    %1605 = vmatpush.msra.mxu0 %v1016
    %1606 = vmatpush.msra.mxu0 %v1015
    %1607 = vmatpush.msra.mxu0 %v1014
    %1608 = vmatpush.msra.mxu0 %v1013
    %1609 = vmatpush.msra.mxu0 %v1012
    %1610 = vmatpush.msra.mxu0 %v1011
    %1611 = vmatpush.msra.mxu0 %v1010
    %1612 = vmatpush.msra.mxu0 %v1009
    %1613 = vmatpush.msra.mxu0 %v1008
    %1614 = vmatpush.msra.mxu0 %v1007
    %1615 = vmatpush.msra.mxu0 %v1006
    %1616 = vmatpush.msra.mxu0 %v1005
    %1617 = vmatmul.f32.gmra.mxu0 %v146
    %v1618 = vpop.f32.mrf.mxu0
    %v1619 = vadd.f32 %v1599, %v1618
    %1620 = vdwg.mxu0
    %1621 = vmatpush.msra.mxu0 %v1036
    %1622 = vmatpush.msra.mxu0 %v1035
    %1623 = vmatpush.msra.mxu0 %v1034
    %1624 = vmatpush.msra.mxu0 %v1033
    %1625 = vmatpush.msra.mxu0 %v1032
    %1626 = vmatpush.msra.mxu0 %v1031
    %1627 = vmatpush.msra.mxu0 %v1030
    %1628 = vmatpush.msra.mxu0 %v1029
    %1629 = vmatpush.msra.mxu0 %v1028
    %1630 = vmatpush.msra.mxu0 %v1027
    %1631 = vmatpush.msra.mxu0 %v1026
    %1632 = vmatpush.msra.mxu0 %v1025
    %1633 = vmatpush.msra.mxu0 %v1024
    %1634 = vmatpush.msra.mxu0 %v1023
    %1635 = vmatpush.msra.mxu0 %v1022
    %1636 = vmatpush.msra.mxu0 %v1021
    %1637 = vmatmul.f32.gmra.mxu0 %v147
    %v1638 = vpop.f32.mrf.mxu0
    %v1639 = vadd.f32 %v1619, %v1638
    %1640 = vdwg.mxu0
    %1641 = vmatpush.msra.mxu0 %v1052
    %1642 = vmatpush.msra.mxu0 %v1051
    %1643 = vmatpush.msra.mxu0 %v1050
    %1644 = vmatpush.msra.mxu0 %v1049
    %1645 = vmatpush.msra.mxu0 %v1048
    %1646 = vmatpush.msra.mxu0 %v1047
    %1647 = vmatpush.msra.mxu0 %v1046
    %1648 = vmatpush.msra.mxu0 %v1045
    %1649 = vmatpush.msra.mxu0 %v1044
    %1650 = vmatpush.msra.mxu0 %v1043
    %1651 = vmatpush.msra.mxu0 %v1042
    %1652 = vmatpush.msra.mxu0 %v1041
    %1653 = vmatpush.msra.mxu0 %v1040
    %1654 = vmatpush.msra.mxu0 %v1039
    %1655 = vmatpush.msra.mxu0 %v1038
    %1656 = vmatpush.msra.mxu0 %v1037
    %1657 = vmatmul.f32.gmra.mxu0 %v148
    %v1658 = vpop.f32.mrf.mxu0
    %v1659 = vadd.f32 %v1639, %v1658
    %1660 = vdwg.mxu0
    %1661 = vmatpush.msra.mxu0 %v1068
    %1662 = vmatpush.msra.mxu0 %v1067
    %1663 = vmatpush.msra.mxu0 %v1066
    %1664 = vmatpush.msra.mxu0 %v1065
    %1665 = vmatpush.msra.mxu0 %v1064
    %1666 = vmatpush.msra.mxu0 %v1063
    %1667 = vmatpush.msra.mxu0 %v1062
    %1668 = vmatpush.msra.mxu0 %v1061
    %1669 = vmatpush.msra.mxu0 %v1060
    %1670 = vmatpush.msra.mxu0 %v1059
    %1671 = vmatpush.msra.mxu0 %v1058
    %1672 = vmatpush.msra.mxu0 %v1057
    %1673 = vmatpush.msra.mxu0 %v1056
    %1674 = vmatpush.msra.mxu0 %v1055
    %1675 = vmatpush.msra.mxu0 %v1054
    %1676 = vmatpush.msra.mxu0 %v1053
    %1677 = vmatmul.f32.gmra.mxu0 %v149
    %v1678 = vpop.f32.mrf.mxu0
    %v1679 = vadd.f32 %v1659, %v1678
    %1680 = vdwg.mxu0
    %1681 = vmatpush.msra.mxu0 %v1084
    %1682 = vmatpush.msra.mxu0 %v1083
    %1683 = vmatpush.msra.mxu0 %v1082
    %1684 = vmatpush.msra.mxu0 %v1081
    %1685 = vmatpush.msra.mxu0 %v1080
    %1686 = vmatpush.msra.mxu0 %v1079
    %1687 = vmatpush.msra.mxu0 %v1078
    %1688 = vmatpush.msra.mxu0 %v1077
    %1689 = vmatpush.msra.mxu0 %v1076
    %1690 = vmatpush.msra.mxu0 %v1075
    %1691 = vmatpush.msra.mxu0 %v1074
    %1692 = vmatpush.msra.mxu0 %v1073
    %1693 = vmatpush.msra.mxu0 %v1072
    %1694 = vmatpush.msra.mxu0 %v1071
    %1695 = vmatpush.msra.mxu0 %v1070
    %1696 = vmatpush.msra.mxu0 %v1069
    %1697 = vmatmul.f32.gmra.mxu0 %v150
    %v1698 = vpop.f32.mrf.mxu0
    %v1699 = vadd.f32 %v1679, %v1698
    %1700 = vdwg.mxu0
    %1701 = vmatpush.msra.mxu0 %v1100
    %1702 = vmatpush.msra.mxu0 %v1099
    %1703 = vmatpush.msra.mxu0 %v1098
    %1704 = vmatpush.msra.mxu0 %v1097
    %1705 = vmatpush.msra.mxu0 %v1096
    %1706 = vmatpush.msra.mxu0 %v1095
    %1707 = vmatpush.msra.mxu0 %v1094
    %1708 = vmatpush.msra.mxu0 %v1093
    %1709 = vmatpush.msra.mxu0 %v1092
    %1710 = vmatpush.msra.mxu0 %v1091
    %1711 = vmatpush.msra.mxu0 %v1090
    %1712 = vmatpush.msra.mxu0 %v1089
    %1713 = vmatpush.msra.mxu0 %v1088
    %1714 = vmatpush.msra.mxu0 %v1087
    %1715 = vmatpush.msra.mxu0 %v1086
    %1716 = vmatpush.msra.mxu0 %v1085
    %1717 = vmatmul.f32.gmra.mxu0 %v151
    %v1718 = vpop.f32.mrf.mxu0
    %v1719 = vadd.f32 %v1699, %v1718
    %1720 = vdwg.mxu0
    %1721 = vmatpush.msra.mxu0 %v1116
    %1722 = vmatpush.msra.mxu0 %v1115
    %1723 = vmatpush.msra.mxu0 %v1114
    %1724 = vmatpush.msra.mxu0 %v1113
    %1725 = vmatpush.msra.mxu0 %v1112
    %1726 = vmatpush.msra.mxu0 %v1111
    %1727 = vmatpush.msra.mxu0 %v1110
    %1728 = vmatpush.msra.mxu0 %v1109
    %1729 = vmatpush.msra.mxu0 %v1108
    %1730 = vmatpush.msra.mxu0 %v1107
    %1731 = vmatpush.msra.mxu0 %v1106
    %1732 = vmatpush.msra.mxu0 %v1105
    %1733 = vmatpush.msra.mxu0 %v1104
    %1734 = vmatpush.msra.mxu0 %v1103
    %1735 = vmatpush.msra.mxu0 %v1102
    %1736 = vmatpush.msra.mxu0 %v1101
    %1737 = vmatmul.f32.gmra.mxu0 %v152
    %v1738 = vpop.f32.mrf.mxu0
    %v1739 = vadd.f32 %v1719, %v1738
    %1740 = vdwg.mxu0
    %1741 = vmatpush.msra.mxu0 %v1132
    %1742 = vmatpush.msra.mxu0 %v1131
    %1743 = vmatpush.msra.mxu0 %v1130
    %1744 = vmatpush.msra.mxu0 %v1129
    %1745 = vmatpush.msra.mxu0 %v1128
    %1746 = vmatpush.msra.mxu0 %v1127
    %1747 = vmatpush.msra.mxu0 %v1126
    %1748 = vmatpush.msra.mxu0 %v1125
    %1749 = vmatpush.msra.mxu0 %v1124
    %1750 = vmatpush.msra.mxu0 %v1123
    %1751 = vmatpush.msra.mxu0 %v1122
    %1752 = vmatpush.msra.mxu0 %v1121
    %1753 = vmatpush.msra.mxu0 %v1120
    %1754 = vmatpush.msra.mxu0 %v1119
    %1755 = vmatpush.msra.mxu0 %v1118
    %1756 = vmatpush.msra.mxu0 %v1117
    %1757 = vmatmul.f32.gmra.mxu0 %v153
    %v1758 = vpop.f32.mrf.mxu0
    %v1759 = vadd.f32 %v1739, %v1758
    %1760 = vdwg.mxu0
    %1761 = vmatpush.msra.mxu0 %v1148
    %1762 = vmatpush.msra.mxu0 %v1147
    %1763 = vmatpush.msra.mxu0 %v1146
    %1764 = vmatpush.msra.mxu0 %v1145
    %1765 = vmatpush.msra.mxu0 %v1144
    %1766 = vmatpush.msra.mxu0 %v1143
    %1767 = vmatpush.msra.mxu0 %v1142
    %1768 = vmatpush.msra.mxu0 %v1141
    %1769 = vmatpush.msra.mxu0 %v1140
    %1770 = vmatpush.msra.mxu0 %v1139
    %1771 = vmatpush.msra.mxu0 %v1138
    %1772 = vmatpush.msra.mxu0 %v1137
    %1773 = vmatpush.msra.mxu0 %v1136
    %1774 = vmatpush.msra.mxu0 %v1135
    %1775 = vmatpush.msra.mxu0 %v1134
    %1776 = vmatpush.msra.mxu0 %v1133
    %1777 = vmatmul.f32.gmra.mxu0 %v154
    %v1778 = vpop.f32.mrf.mxu0
    %v1779 = vadd.f32 %v1759, %v1778
    %1780 = vdwg.mxu0
    %1781 = vmatpush.msra.mxu0 %v1164
    %1782 = vmatpush.msra.mxu0 %v1163
    %1783 = vmatpush.msra.mxu0 %v1162
    %1784 = vmatpush.msra.mxu0 %v1161
    %1785 = vmatpush.msra.mxu0 %v1160
    %1786 = vmatpush.msra.mxu0 %v1159
    %1787 = vmatpush.msra.mxu0 %v1158
    %1788 = vmatpush.msra.mxu0 %v1157
    %1789 = vmatpush.msra.mxu0 %v1156
    %1790 = vmatpush.msra.mxu0 %v1155
    %1791 = vmatpush.msra.mxu0 %v1154
    %1792 = vmatpush.msra.mxu0 %v1153
    %1793 = vmatpush.msra.mxu0 %v1152
    %1794 = vmatpush.msra.mxu0 %v1151
    %1795 = vmatpush.msra.mxu0 %v1150
    %1796 = vmatpush.msra.mxu0 %v1149
    %1797 = vmatmul.f32.gmra.mxu0 %v155
    %v1798 = vpop.f32.mrf.mxu0
    %v1799 = vadd.f32 %v1779, %v1798
    %1800 = vdwg.mxu0
    %1801 = vmatpush.msra.mxu0 %v1180
    %1802 = vmatpush.msra.mxu0 %v1179
    %1803 = vmatpush.msra.mxu0 %v1178
    %1804 = vmatpush.msra.mxu0 %v1177
    %1805 = vmatpush.msra.mxu0 %v1176
    %1806 = vmatpush.msra.mxu0 %v1175
    %1807 = vmatpush.msra.mxu0 %v1174
    %1808 = vmatpush.msra.mxu0 %v1173
    %1809 = vmatpush.msra.mxu0 %v1172
    %1810 = vmatpush.msra.mxu0 %v1171
    %1811 = vmatpush.msra.mxu0 %v1170
    %1812 = vmatpush.msra.mxu0 %v1169
    %1813 = vmatpush.msra.mxu0 %v1168
    %1814 = vmatpush.msra.mxu0 %v1167
    %1815 = vmatpush.msra.mxu0 %v1166
    %1816 = vmatpush.msra.mxu0 %v1165
    %1817 = vmatmul.f32.gmra.mxu0 %v156
    %v1818 = vpop.f32.mrf.mxu0
    %v1819 = vadd.f32 %v1799, %v1818
    %1820 = vdwg.mxu0
    %1821 = vmatpush.msra.mxu0 %v172
    %1822 = vmatpush.msra.mxu0 %v171
    %1823 = vmatpush.msra.mxu0 %v170
    %1824 = vmatpush.msra.mxu0 %v169
    %1825 = vmatpush.msra.mxu0 %v168
    %1826 = vmatpush.msra.mxu0 %v167
    %1827 = vmatpush.msra.mxu0 %v166
    %1828 = vmatpush.msra.mxu0 %v165
    %1829 = vmatpush.msra.mxu0 %v164
    %1830 = vmatpush.msra.mxu0 %v163
    %1831 = vmatpush.msra.mxu0 %v162
    %1832 = vmatpush.msra.mxu0 %v161
    %1833 = vmatpush.msra.mxu0 %v160
    %1834 = vmatpush.msra.mxu0 %v159
    %1835 = vmatpush.msra.mxu0 %v158
    %1836 = vmatpush.msra.mxu0 %v157
    %1837 = vmatmul.f32.gmra.mxu0 %v93
    %v1838 = vpop.f32.mrf.mxu0
    %v1839 = vadd.f32 %v1819, %v1838
    %1840 = vdwg.mxu0
    %1841 = vmatpush.msra.mxu0 %v188
    %1842 = vmatpush.msra.mxu0 %v187
    %1843 = vmatpush.msra.mxu0 %v186
    %1844 = vmatpush.msra.mxu0 %v185
    %1845 = vmatpush.msra.mxu0 %v184
    %1846 = vmatpush.msra.mxu0 %v183
    %1847 = vmatpush.msra.mxu0 %v182
    %1848 = vmatpush.msra.mxu0 %v181
    %1849 = vmatpush.msra.mxu0 %v180
    %1850 = vmatpush.msra.mxu0 %v179
    %1851 = vmatpush.msra.mxu0 %v178
    %1852 = vmatpush.msra.mxu0 %v177
    %1853 = vmatpush.msra.mxu0 %v176
    %1854 = vmatpush.msra.mxu0 %v175
    %1855 = vmatpush.msra.mxu0 %v174
    %1856 = vmatpush.msra.mxu0 %v173
    %1857 = vmatmul.f32.gmra.mxu0 %v94
    %v1858 = vpop.f32.mrf.mxu0
    %v1859 = vadd.f32 %v1839, %v1858
    %1860 = vdwg.mxu0
    %1861 = vmatpush.msra.mxu0 %v204
    %1862 = vmatpush.msra.mxu0 %v203
    %1863 = vmatpush.msra.mxu0 %v202
    %1864 = vmatpush.msra.mxu0 %v201
    %1865 = vmatpush.msra.mxu0 %v200
    %1866 = vmatpush.msra.mxu0 %v199
    %1867 = vmatpush.msra.mxu0 %v198
    %1868 = vmatpush.msra.mxu0 %v197
    %1869 = vmatpush.msra.mxu0 %v196
    %1870 = vmatpush.msra.mxu0 %v195
    %1871 = vmatpush.msra.mxu0 %v194
    %1872 = vmatpush.msra.mxu0 %v193
    %1873 = vmatpush.msra.mxu0 %v192
    %1874 = vmatpush.msra.mxu0 %v191
    %1875 = vmatpush.msra.mxu0 %v190
    %1876 = vmatpush.msra.mxu0 %v189
    %1877 = vmatmul.f32.gmra.mxu0 %v95
    %v1878 = vpop.f32.mrf.mxu0
    %v1879 = vadd.f32 %v1859, %v1878
    %1880 = vdwg.mxu0
    %1881 = vmatpush.msra.mxu0 %v220
    %1882 = vmatpush.msra.mxu0 %v219
    %1883 = vmatpush.msra.mxu0 %v218
    %1884 = vmatpush.msra.mxu0 %v217
    %1885 = vmatpush.msra.mxu0 %v216
    %1886 = vmatpush.msra.mxu0 %v215
    %1887 = vmatpush.msra.mxu0 %v214
    %1888 = vmatpush.msra.mxu0 %v213
    %1889 = vmatpush.msra.mxu0 %v212
    %1890 = vmatpush.msra.mxu0 %v211
    %1891 = vmatpush.msra.mxu0 %v210
    %1892 = vmatpush.msra.mxu0 %v209
    %1893 = vmatpush.msra.mxu0 %v208
    %1894 = vmatpush.msra.mxu0 %v207
    %1895 = vmatpush.msra.mxu0 %v206
    %1896 = vmatpush.msra.mxu0 %v205
    %1897 = vmatmul.f32.gmra.mxu0 %v96
    %v1898 = vpop.f32.mrf.mxu0
    %v1899 = vadd.f32 %v1879, %v1898
    %1900 = vdwg.mxu0
    %1901 = vmatpush.msra.mxu0 %v236
    %1902 = vmatpush.msra.mxu0 %v235
    %1903 = vmatpush.msra.mxu0 %v234
    %1904 = vmatpush.msra.mxu0 %v233
    %1905 = vmatpush.msra.mxu0 %v232
    %1906 = vmatpush.msra.mxu0 %v231
    %1907 = vmatpush.msra.mxu0 %v230
    %1908 = vmatpush.msra.mxu0 %v229
    %1909 = vmatpush.msra.mxu0 %v228
    %1910 = vmatpush.msra.mxu0 %v227
    %1911 = vmatpush.msra.mxu0 %v226
    %1912 = vmatpush.msra.mxu0 %v225
    %1913 = vmatpush.msra.mxu0 %v224
    %1914 = vmatpush.msra.mxu0 %v223
    %1915 = vmatpush.msra.mxu0 %v222
    %1916 = vmatpush.msra.mxu0 %v221
    %1917 = vmatmul.f32.gmra.mxu0 %v97
    %v1918 = vpop.f32.mrf.mxu0
    %v1919 = vadd.f32 %v1899, %v1918
    %1920 = vdwg.mxu0
    %1921 = vmatpush.msra.mxu0 %v252
    %1922 = vmatpush.msra.mxu0 %v251
    %1923 = vmatpush.msra.mxu0 %v250
    %1924 = vmatpush.msra.mxu0 %v249
    %1925 = vmatpush.msra.mxu0 %v248
    %1926 = vmatpush.msra.mxu0 %v247
    %1927 = vmatpush.msra.mxu0 %v246
    %1928 = vmatpush.msra.mxu0 %v245
    %1929 = vmatpush.msra.mxu0 %v244
    %1930 = vmatpush.msra.mxu0 %v243
    %1931 = vmatpush.msra.mxu0 %v242
    %1932 = vmatpush.msra.mxu0 %v241
    %1933 = vmatpush.msra.mxu0 %v240
    %1934 = vmatpush.msra.mxu0 %v239
    %1935 = vmatpush.msra.mxu0 %v238
    %1936 = vmatpush.msra.mxu0 %v237
    %1937 = vmatmul.f32.gmra.mxu0 %v98
    %v1938 = vpop.f32.mrf.mxu0
    %v1939 = vadd.f32 %v1919, %v1938
    %1940 = vdwg.mxu0
    %1941 = vmatpush.msra.mxu0 %v268
    %1942 = vmatpush.msra.mxu0 %v267
    %1943 = vmatpush.msra.mxu0 %v266
    %1944 = vmatpush.msra.mxu0 %v265
    %1945 = vmatpush.msra.mxu0 %v264
    %1946 = vmatpush.msra.mxu0 %v263
    %1947 = vmatpush.msra.mxu0 %v262
    %1948 = vmatpush.msra.mxu0 %v261
    %1949 = vmatpush.msra.mxu0 %v260
    %1950 = vmatpush.msra.mxu0 %v259
    %1951 = vmatpush.msra.mxu0 %v258
    %1952 = vmatpush.msra.mxu0 %v257
    %1953 = vmatpush.msra.mxu0 %v256
    %1954 = vmatpush.msra.mxu0 %v255
    %1955 = vmatpush.msra.mxu0 %v254
    %1956 = vmatpush.msra.mxu0 %v253
    %1957 = vmatmul.f32.gmra.mxu0 %v99
    %v1958 = vpop.f32.mrf.mxu0
    %v1959 = vadd.f32 %v1939, %v1958
    %1960 = vdwg.mxu0
    %1961 = vmatpush.msra.mxu0 %v284
    %1962 = vmatpush.msra.mxu0 %v283
    %1963 = vmatpush.msra.mxu0 %v282
    %1964 = vmatpush.msra.mxu0 %v281
    %1965 = vmatpush.msra.mxu0 %v280
    %1966 = vmatpush.msra.mxu0 %v279
    %1967 = vmatpush.msra.mxu0 %v278
    %1968 = vmatpush.msra.mxu0 %v277
    %1969 = vmatpush.msra.mxu0 %v276
    %1970 = vmatpush.msra.mxu0 %v275
    %1971 = vmatpush.msra.mxu0 %v274
    %1972 = vmatpush.msra.mxu0 %v273
    %1973 = vmatpush.msra.mxu0 %v272
    %1974 = vmatpush.msra.mxu0 %v271
    %1975 = vmatpush.msra.mxu0 %v270
    %1976 = vmatpush.msra.mxu0 %v269
    %1977 = vmatmul.f32.gmra.mxu0 %v100
    %v1978 = vpop.f32.mrf.mxu0
    %v1979 = vadd.f32 %v1959, %v1978
    %1980 = vdwg.mxu0
    %1981 = vmatpush.msra.mxu0 %v300
    %1982 = vmatpush.msra.mxu0 %v299
    %1983 = vmatpush.msra.mxu0 %v298
    %1984 = vmatpush.msra.mxu0 %v297
    %1985 = vmatpush.msra.mxu0 %v296
    %1986 = vmatpush.msra.mxu0 %v295
    %1987 = vmatpush.msra.mxu0 %v294
    %1988 = vmatpush.msra.mxu0 %v293
    %1989 = vmatpush.msra.mxu0 %v292
    %1990 = vmatpush.msra.mxu0 %v291
    %1991 = vmatpush.msra.mxu0 %v290
    %1992 = vmatpush.msra.mxu0 %v289
    %1993 = vmatpush.msra.mxu0 %v288
    %1994 = vmatpush.msra.mxu0 %v287
    %1995 = vmatpush.msra.mxu0 %v286
    %1996 = vmatpush.msra.mxu0 %v285
    %1997 = vmatmul.f32.gmra.mxu0 %v101
    %v1998 = vpop.f32.mrf.mxu0
    %v1999 = vadd.f32 %v1979, %v1998
    %2000 = vdwg.mxu0
    %2001 = vmatpush.msra.mxu0 %v316
    %2002 = vmatpush.msra.mxu0 %v315
    %2003 = vmatpush.msra.mxu0 %v314
    %2004 = vmatpush.msra.mxu0 %v313
    %2005 = vmatpush.msra.mxu0 %v312
    %2006 = vmatpush.msra.mxu0 %v311
    %2007 = vmatpush.msra.mxu0 %v310
    %2008 = vmatpush.msra.mxu0 %v309
    %2009 = vmatpush.msra.mxu0 %v308
    %2010 = vmatpush.msra.mxu0 %v307
    %2011 = vmatpush.msra.mxu0 %v306
    %2012 = vmatpush.msra.mxu0 %v305
    %2013 = vmatpush.msra.mxu0 %v304
    %2014 = vmatpush.msra.mxu0 %v303
    %2015 = vmatpush.msra.mxu0 %v302
    %2016 = vmatpush.msra.mxu0 %v301
    %2017 = vmatmul.f32.gmra.mxu0 %v102
    %v2018 = vpop.f32.mrf.mxu0
    %v2019 = vadd.f32 %v1999, %v2018
    %2020 = vdwg.mxu0
    %2021 = vmatpush.msra.mxu0 %v332
    %2022 = vmatpush.msra.mxu0 %v331
    %2023 = vmatpush.msra.mxu0 %v330
    %2024 = vmatpush.msra.mxu0 %v329
    %2025 = vmatpush.msra.mxu0 %v328
    %2026 = vmatpush.msra.mxu0 %v327
    %2027 = vmatpush.msra.mxu0 %v326
    %2028 = vmatpush.msra.mxu0 %v325
    %2029 = vmatpush.msra.mxu0 %v324
    %2030 = vmatpush.msra.mxu0 %v323
    %2031 = vmatpush.msra.mxu0 %v322
    %2032 = vmatpush.msra.mxu0 %v321
    %2033 = vmatpush.msra.mxu0 %v320
    %2034 = vmatpush.msra.mxu0 %v319
    %2035 = vmatpush.msra.mxu0 %v318
    %2036 = vmatpush.msra.mxu0 %v317
    %2037 = vmatmul.f32.gmra.mxu0 %v103
    %v2038 = vpop.f32.mrf.mxu0
    %v2039 = vadd.f32 %v2019, %v2038
    %2040 = vdwg.mxu0
    %2041 = vmatpush.msra.mxu0 %v348
    %2042 = vmatpush.msra.mxu0 %v347
    %2043 = vmatpush.msra.mxu0 %v346
    %2044 = vmatpush.msra.mxu0 %v345
    %2045 = vmatpush.msra.mxu0 %v344
    %2046 = vmatpush.msra.mxu0 %v343
    %2047 = vmatpush.msra.mxu0 %v342
    %2048 = vmatpush.msra.mxu0 %v341
    %2049 = vmatpush.msra.mxu0 %v340
    %2050 = vmatpush.msra.mxu0 %v339
    %2051 = vmatpush.msra.mxu0 %v338
    %2052 = vmatpush.msra.mxu0 %v337
    %2053 = vmatpush.msra.mxu0 %v336
    %2054 = vmatpush.msra.mxu0 %v335
    %2055 = vmatpush.msra.mxu0 %v334
    %2056 = vmatpush.msra.mxu0 %v333
    %2057 = vmatmul.f32.gmra.mxu0 %v104
    %v2058 = vpop.f32.mrf.mxu0
    %v2059 = vadd.f32 %v2039, %v2058
    %2060 = vdwg.mxu0
    %2061 = vmatpush.msra.mxu0 %v364
    %2062 = vmatpush.msra.mxu0 %v363
    %2063 = vmatpush.msra.mxu0 %v362
    %2064 = vmatpush.msra.mxu0 %v361
    %2065 = vmatpush.msra.mxu0 %v360
    %2066 = vmatpush.msra.mxu0 %v359
    %2067 = vmatpush.msra.mxu0 %v358
    %2068 = vmatpush.msra.mxu0 %v357
    %2069 = vmatpush.msra.mxu0 %v356
    %2070 = vmatpush.msra.mxu0 %v355
    %2071 = vmatpush.msra.mxu0 %v354
    %2072 = vmatpush.msra.mxu0 %v353
    %2073 = vmatpush.msra.mxu0 %v352
    %2074 = vmatpush.msra.mxu0 %v351
    %2075 = vmatpush.msra.mxu0 %v350
    %2076 = vmatpush.msra.mxu0 %v349
    %2077 = vmatmul.f32.gmra.mxu0 %v105
    %v2078 = vpop.f32.mrf.mxu0
    %v2079 = vadd.f32 %v2059, %v2078
    %2080 = vdwg.mxu0
    %2081 = vmatpush.msra.mxu0 %v380
    %2082 = vmatpush.msra.mxu0 %v379
    %2083 = vmatpush.msra.mxu0 %v378
    %2084 = vmatpush.msra.mxu0 %v377
    %2085 = vmatpush.msra.mxu0 %v376
    %2086 = vmatpush.msra.mxu0 %v375
    %2087 = vmatpush.msra.mxu0 %v374
    %2088 = vmatpush.msra.mxu0 %v373
    %2089 = vmatpush.msra.mxu0 %v372
    %2090 = vmatpush.msra.mxu0 %v371
    %2091 = vmatpush.msra.mxu0 %v370
    %2092 = vmatpush.msra.mxu0 %v369
    %2093 = vmatpush.msra.mxu0 %v368
    %2094 = vmatpush.msra.mxu0 %v367
    %2095 = vmatpush.msra.mxu0 %v366
    %2096 = vmatpush.msra.mxu0 %v365
    %2097 = vmatmul.f32.gmra.mxu0 %v106
    %v2098 = vpop.f32.mrf.mxu0
    %v2099 = vadd.f32 %v2079, %v2098
    %2100 = vdwg.mxu0
    %2101 = vmatpush.msra.mxu0 %v396
    %2102 = vmatpush.msra.mxu0 %v395
    %2103 = vmatpush.msra.mxu0 %v394
    %2104 = vmatpush.msra.mxu0 %v393
    %2105 = vmatpush.msra.mxu0 %v392
    %2106 = vmatpush.msra.mxu0 %v391
    %2107 = vmatpush.msra.mxu0 %v390
    %2108 = vmatpush.msra.mxu0 %v389
    %2109 = vmatpush.msra.mxu0 %v388
    %2110 = vmatpush.msra.mxu0 %v387
    %2111 = vmatpush.msra.mxu0 %v386
    %2112 = vmatpush.msra.mxu0 %v385
    %2113 = vmatpush.msra.mxu0 %v384
    %2114 = vmatpush.msra.mxu0 %v383
    %2115 = vmatpush.msra.mxu0 %v382
    %2116 = vmatpush.msra.mxu0 %v381
    %2117 = vmatmul.f32.gmra.mxu0 %v107
    %v2118 = vpop.f32.mrf.mxu0
    %v2119 = vadd.f32 %v2099, %v2118
    %2120 = vdwg.mxu0
    %2121 = vmatpush.msra.mxu0 %v412
    %2122 = vmatpush.msra.mxu0 %v411
    %2123 = vmatpush.msra.mxu0 %v410
    %2124 = vmatpush.msra.mxu0 %v409
    %2125 = vmatpush.msra.mxu0 %v408
    %2126 = vmatpush.msra.mxu0 %v407
    %2127 = vmatpush.msra.mxu0 %v406
    %2128 = vmatpush.msra.mxu0 %v405
    %2129 = vmatpush.msra.mxu0 %v404
    %2130 = vmatpush.msra.mxu0 %v403
    %2131 = vmatpush.msra.mxu0 %v402
    %2132 = vmatpush.msra.mxu0 %v401
    %2133 = vmatpush.msra.mxu0 %v400
    %2134 = vmatpush.msra.mxu0 %v399
    %2135 = vmatpush.msra.mxu0 %v398
    %2136 = vmatpush.msra.mxu0 %v397
    %2137 = vmatmul.f32.gmra.mxu0 %v108
    %v2138 = vpop.f32.mrf.mxu0
    %v2139 = vadd.f32 %v2119, %v2138
    %2140 = vdwg.mxu0
    %2141 = vmatpush.msra.mxu0 %v428
    %2142 = vmatpush.msra.mxu0 %v427
    %2143 = vmatpush.msra.mxu0 %v426
    %2144 = vmatpush.msra.mxu0 %v425
    %2145 = vmatpush.msra.mxu0 %v424
    %2146 = vmatpush.msra.mxu0 %v423
    %2147 = vmatpush.msra.mxu0 %v422
    %2148 = vmatpush.msra.mxu0 %v421
    %2149 = vmatpush.msra.mxu0 %v420
    %2150 = vmatpush.msra.mxu0 %v419
    %2151 = vmatpush.msra.mxu0 %v418
    %2152 = vmatpush.msra.mxu0 %v417
    %2153 = vmatpush.msra.mxu0 %v416
    %2154 = vmatpush.msra.mxu0 %v415
    %2155 = vmatpush.msra.mxu0 %v414
    %2156 = vmatpush.msra.mxu0 %v413
    %2157 = vmatmul.f32.gmra.mxu0 %v109
    %v2158 = vpop.f32.mrf.mxu0
    %v2159 = vadd.f32 %v2139, %v2158
    %2160 = vdwg.mxu0
    %2161 = vmatpush.msra.mxu0 %v444
    %2162 = vmatpush.msra.mxu0 %v443
    %2163 = vmatpush.msra.mxu0 %v442
    %2164 = vmatpush.msra.mxu0 %v441
    %2165 = vmatpush.msra.mxu0 %v440
    %2166 = vmatpush.msra.mxu0 %v439
    %2167 = vmatpush.msra.mxu0 %v438
    %2168 = vmatpush.msra.mxu0 %v437
    %2169 = vmatpush.msra.mxu0 %v436
    %2170 = vmatpush.msra.mxu0 %v435
    %2171 = vmatpush.msra.mxu0 %v434
    %2172 = vmatpush.msra.mxu0 %v433
    %2173 = vmatpush.msra.mxu0 %v432
    %2174 = vmatpush.msra.mxu0 %v431
    %2175 = vmatpush.msra.mxu0 %v430
    %2176 = vmatpush.msra.mxu0 %v429
    %2177 = vmatmul.f32.gmra.mxu0 %v110
    %v2178 = vpop.f32.mrf.mxu0
    %v2179 = vadd.f32 %v2159, %v2178
    %2180 = vdwg.mxu0
    %2181 = vmatpush.msra.mxu0 %v460
    %2182 = vmatpush.msra.mxu0 %v459
    %2183 = vmatpush.msra.mxu0 %v458
    %2184 = vmatpush.msra.mxu0 %v457
    %2185 = vmatpush.msra.mxu0 %v456
    %2186 = vmatpush.msra.mxu0 %v455
    %2187 = vmatpush.msra.mxu0 %v454
    %2188 = vmatpush.msra.mxu0 %v453
    %2189 = vmatpush.msra.mxu0 %v452
    %2190 = vmatpush.msra.mxu0 %v451
    %2191 = vmatpush.msra.mxu0 %v450
    %2192 = vmatpush.msra.mxu0 %v449
    %2193 = vmatpush.msra.mxu0 %v448
    %2194 = vmatpush.msra.mxu0 %v447
    %2195 = vmatpush.msra.mxu0 %v446
    %2196 = vmatpush.msra.mxu0 %v445
    %2197 = vmatmul.f32.gmra.mxu0 %v111
    %v2198 = vpop.f32.mrf.mxu0
    %v2199 = vadd.f32 %v2179, %v2198
    %2200 = vdwg.mxu0
    %2201 = vmatpush.msra.mxu0 %v476
    %2202 = vmatpush.msra.mxu0 %v475
    %2203 = vmatpush.msra.mxu0 %v474
    %2204 = vmatpush.msra.mxu0 %v473
    %2205 = vmatpush.msra.mxu0 %v472
    %2206 = vmatpush.msra.mxu0 %v471
    %2207 = vmatpush.msra.mxu0 %v470
    %2208 = vmatpush.msra.mxu0 %v469
    %2209 = vmatpush.msra.mxu0 %v468
    %2210 = vmatpush.msra.mxu0 %v467
    %2211 = vmatpush.msra.mxu0 %v466
    %2212 = vmatpush.msra.mxu0 %v465
    %2213 = vmatpush.msra.mxu0 %v464
    %2214 = vmatpush.msra.mxu0 %v463
    %2215 = vmatpush.msra.mxu0 %v462
    %2216 = vmatpush.msra.mxu0 %v461
    %2217 = vmatmul.f32.gmra.mxu0 %v112
    %v2218 = vpop.f32.mrf.mxu0
    %v2219 = vadd.f32 %v2199, %v2218
    %2220 = vdwg.mxu0
    %2221 = vmatpush.msra.mxu0 %v492
    %2222 = vmatpush.msra.mxu0 %v491
    %2223 = vmatpush.msra.mxu0 %v490
    %2224 = vmatpush.msra.mxu0 %v489
    %2225 = vmatpush.msra.mxu0 %v488
    %2226 = vmatpush.msra.mxu0 %v487
    %2227 = vmatpush.msra.mxu0 %v486
    %2228 = vmatpush.msra.mxu0 %v485
    %2229 = vmatpush.msra.mxu0 %v484
    %2230 = vmatpush.msra.mxu0 %v483
    %2231 = vmatpush.msra.mxu0 %v482
    %2232 = vmatpush.msra.mxu0 %v481
    %2233 = vmatpush.msra.mxu0 %v480
    %2234 = vmatpush.msra.mxu0 %v479
    %2235 = vmatpush.msra.mxu0 %v478
    %2236 = vmatpush.msra.mxu0 %v477
    %2237 = vmatmul.f32.gmra.mxu0 %v113
    %v2238 = vpop.f32.mrf.mxu0
    %v2239 = vadd.f32 %v2219, %v2238
    %2240 = vdwg.mxu0
    %2241 = vmatpush.msra.mxu0 %v508
    %2242 = vmatpush.msra.mxu0 %v507
    %2243 = vmatpush.msra.mxu0 %v506
    %2244 = vmatpush.msra.mxu0 %v505
    %2245 = vmatpush.msra.mxu0 %v504
    %2246 = vmatpush.msra.mxu0 %v503
    %2247 = vmatpush.msra.mxu0 %v502
    %2248 = vmatpush.msra.mxu0 %v501
    %2249 = vmatpush.msra.mxu0 %v500
    %2250 = vmatpush.msra.mxu0 %v499
    %2251 = vmatpush.msra.mxu0 %v498
    %2252 = vmatpush.msra.mxu0 %v497
    %2253 = vmatpush.msra.mxu0 %v496
    %2254 = vmatpush.msra.mxu0 %v495
    %2255 = vmatpush.msra.mxu0 %v494
    %2256 = vmatpush.msra.mxu0 %v493
    %2257 = vmatmul.f32.gmra.mxu0 %v114
    %v2258 = vpop.f32.mrf.mxu0
    %v2259 = vadd.f32 %v2239, %v2258
    %2260 = vdwg.mxu0
    %2261 = vmatpush.msra.mxu0 %v524
    %2262 = vmatpush.msra.mxu0 %v523
    %2263 = vmatpush.msra.mxu0 %v522
    %2264 = vmatpush.msra.mxu0 %v521
    %2265 = vmatpush.msra.mxu0 %v520
    %2266 = vmatpush.msra.mxu0 %v519
    %2267 = vmatpush.msra.mxu0 %v518
    %2268 = vmatpush.msra.mxu0 %v517
    %2269 = vmatpush.msra.mxu0 %v516
    %2270 = vmatpush.msra.mxu0 %v515
    %2271 = vmatpush.msra.mxu0 %v514
    %2272 = vmatpush.msra.mxu0 %v513
    %2273 = vmatpush.msra.mxu0 %v512
    %2274 = vmatpush.msra.mxu0 %v511
    %2275 = vmatpush.msra.mxu0 %v510
    %2276 = vmatpush.msra.mxu0 %v509
    %2277 = vmatmul.f32.gmra.mxu0 %v115
    %v2278 = vpop.f32.mrf.mxu0
    %v2279 = vadd.f32 %v2259, %v2278
    %2280 = vdwg.mxu0
    %2281 = vmatpush.msra.mxu0 %v540
    %2282 = vmatpush.msra.mxu0 %v539
    %2283 = vmatpush.msra.mxu0 %v538
    %2284 = vmatpush.msra.mxu0 %v537
    %2285 = vmatpush.msra.mxu0 %v536
    %2286 = vmatpush.msra.mxu0 %v535
    %2287 = vmatpush.msra.mxu0 %v534
    %2288 = vmatpush.msra.mxu0 %v533
    %2289 = vmatpush.msra.mxu0 %v532
    %2290 = vmatpush.msra.mxu0 %v531
    %2291 = vmatpush.msra.mxu0 %v530
    %2292 = vmatpush.msra.mxu0 %v529
    %2293 = vmatpush.msra.mxu0 %v528
    %2294 = vmatpush.msra.mxu0 %v527
    %2295 = vmatpush.msra.mxu0 %v526
    %2296 = vmatpush.msra.mxu0 %v525
    %2297 = vmatmul.f32.gmra.mxu0 %v116
    %v2298 = vpop.f32.mrf.mxu0
    %v2299 = vadd.f32 %v2279, %v2298
    %2300 = vdwg.mxu0
    %2301 = vmatpush.msra.mxu0 %v556
    %2302 = vmatpush.msra.mxu0 %v555
    %2303 = vmatpush.msra.mxu0 %v554
    %2304 = vmatpush.msra.mxu0 %v553
    %2305 = vmatpush.msra.mxu0 %v552
    %2306 = vmatpush.msra.mxu0 %v551
    %2307 = vmatpush.msra.mxu0 %v550
    %2308 = vmatpush.msra.mxu0 %v549
    %2309 = vmatpush.msra.mxu0 %v548
    %2310 = vmatpush.msra.mxu0 %v547
    %2311 = vmatpush.msra.mxu0 %v546
    %2312 = vmatpush.msra.mxu0 %v545
    %2313 = vmatpush.msra.mxu0 %v544
    %2314 = vmatpush.msra.mxu0 %v543
    %2315 = vmatpush.msra.mxu0 %v542
    %2316 = vmatpush.msra.mxu0 %v541
    %2317 = vmatmul.f32.gmra.mxu0 %v117
    %v2318 = vpop.f32.mrf.mxu0
    %v2319 = vadd.f32 %v2299, %v2318
    %2320 = vdwg.mxu0
    %2321 = vmatpush.msra.mxu0 %v572
    %2322 = vmatpush.msra.mxu0 %v571
    %2323 = vmatpush.msra.mxu0 %v570
    %2324 = vmatpush.msra.mxu0 %v569
    %2325 = vmatpush.msra.mxu0 %v568
    %2326 = vmatpush.msra.mxu0 %v567
    %2327 = vmatpush.msra.mxu0 %v566
    %2328 = vmatpush.msra.mxu0 %v565
    %2329 = vmatpush.msra.mxu0 %v564
    %2330 = vmatpush.msra.mxu0 %v563
    %2331 = vmatpush.msra.mxu0 %v562
    %2332 = vmatpush.msra.mxu0 %v561
    %2333 = vmatpush.msra.mxu0 %v560
    %2334 = vmatpush.msra.mxu0 %v559
    %2335 = vmatpush.msra.mxu0 %v558
    %2336 = vmatpush.msra.mxu0 %v557
    %2337 = vmatmul.f32.gmra.mxu0 %v118
    %v2338 = vpop.f32.mrf.mxu0
    %v2339 = vadd.f32 %v2319, %v2338
    %2340 = vdwg.mxu0
    %2341 = vmatpush.msra.mxu0 %v588
    %2342 = vmatpush.msra.mxu0 %v587
    %2343 = vmatpush.msra.mxu0 %v586
    %2344 = vmatpush.msra.mxu0 %v585
    %2345 = vmatpush.msra.mxu0 %v584
    %2346 = vmatpush.msra.mxu0 %v583
    %2347 = vmatpush.msra.mxu0 %v582
    %2348 = vmatpush.msra.mxu0 %v581
    %2349 = vmatpush.msra.mxu0 %v580
    %2350 = vmatpush.msra.mxu0 %v579
    %2351 = vmatpush.msra.mxu0 %v578
    %2352 = vmatpush.msra.mxu0 %v577
    %2353 = vmatpush.msra.mxu0 %v576
    %2354 = vmatpush.msra.mxu0 %v575
    %2355 = vmatpush.msra.mxu0 %v574
    %2356 = vmatpush.msra.mxu0 %v573
    %2357 = vmatmul.f32.gmra.mxu0 %v119
    %v2358 = vpop.f32.mrf.mxu0
    %v2359 = vadd.f32 %v2339, %v2358
    %2360 = vdwg.mxu0
    %2361 = vmatpush.msra.mxu0 %v604
    %2362 = vmatpush.msra.mxu0 %v603
    %2363 = vmatpush.msra.mxu0 %v602
    %2364 = vmatpush.msra.mxu0 %v601
    %2365 = vmatpush.msra.mxu0 %v600
    %2366 = vmatpush.msra.mxu0 %v599
    %2367 = vmatpush.msra.mxu0 %v598
    %2368 = vmatpush.msra.mxu0 %v597
    %2369 = vmatpush.msra.mxu0 %v596
    %2370 = vmatpush.msra.mxu0 %v595
    %2371 = vmatpush.msra.mxu0 %v594
    %2372 = vmatpush.msra.mxu0 %v593
    %2373 = vmatpush.msra.mxu0 %v592
    %2374 = vmatpush.msra.mxu0 %v591
    %2375 = vmatpush.msra.mxu0 %v590
    %2376 = vmatpush.msra.mxu0 %v589
    %2377 = vmatmul.f32.gmra.mxu0 %v120
    %v2378 = vpop.f32.mrf.mxu0
    %v2379 = vadd.f32 %v2359, %v2378
    %2380 = vdwg.mxu0
    %2381 = vmatpush.msra.mxu0 %v620
    %2382 = vmatpush.msra.mxu0 %v619
    %2383 = vmatpush.msra.mxu0 %v618
    %2384 = vmatpush.msra.mxu0 %v617
    %2385 = vmatpush.msra.mxu0 %v616
    %2386 = vmatpush.msra.mxu0 %v615
    %2387 = vmatpush.msra.mxu0 %v614
    %2388 = vmatpush.msra.mxu0 %v613
    %2389 = vmatpush.msra.mxu0 %v612
    %2390 = vmatpush.msra.mxu0 %v611
    %2391 = vmatpush.msra.mxu0 %v610
    %2392 = vmatpush.msra.mxu0 %v609
    %2393 = vmatpush.msra.mxu0 %v608
    %2394 = vmatpush.msra.mxu0 %v607
    %2395 = vmatpush.msra.mxu0 %v606
    %2396 = vmatpush.msra.mxu0 %v605
    %2397 = vmatmul.f32.gmra.mxu0 %v121
    %v2398 = vpop.f32.mrf.mxu0
    %v2399 = vadd.f32 %v2379, %v2398
    %2400 = vdwg.mxu0
    %2401 = vmatpush.msra.mxu0 %v636
    %2402 = vmatpush.msra.mxu0 %v635
    %2403 = vmatpush.msra.mxu0 %v634
    %2404 = vmatpush.msra.mxu0 %v633
    %2405 = vmatpush.msra.mxu0 %v632
    %2406 = vmatpush.msra.mxu0 %v631
    %2407 = vmatpush.msra.mxu0 %v630
    %2408 = vmatpush.msra.mxu0 %v629
    %2409 = vmatpush.msra.mxu0 %v628
    %2410 = vmatpush.msra.mxu0 %v627
    %2411 = vmatpush.msra.mxu0 %v626
    %2412 = vmatpush.msra.mxu0 %v625
    %2413 = vmatpush.msra.mxu0 %v624
    %2414 = vmatpush.msra.mxu0 %v623
    %2415 = vmatpush.msra.mxu0 %v622
    %2416 = vmatpush.msra.mxu0 %v621
    %2417 = vmatmul.f32.gmra.mxu0 %v122
    %v2418 = vpop.f32.mrf.mxu0
    %v2419 = vadd.f32 %v2399, %v2418
    %2420 = vdwg.mxu0
    %2421 = vmatpush.msra.mxu0 %v652
    %2422 = vmatpush.msra.mxu0 %v651
    %2423 = vmatpush.msra.mxu0 %v650
    %2424 = vmatpush.msra.mxu0 %v649
    %2425 = vmatpush.msra.mxu0 %v648
    %2426 = vmatpush.msra.mxu0 %v647
    %2427 = vmatpush.msra.mxu0 %v646
    %2428 = vmatpush.msra.mxu0 %v645
    %2429 = vmatpush.msra.mxu0 %v644
    %2430 = vmatpush.msra.mxu0 %v643
    %2431 = vmatpush.msra.mxu0 %v642
    %2432 = vmatpush.msra.mxu0 %v641
    %2433 = vmatpush.msra.mxu0 %v640
    %2434 = vmatpush.msra.mxu0 %v639
    %2435 = vmatpush.msra.mxu0 %v638
    %2436 = vmatpush.msra.mxu0 %v637
    %2437 = vmatmul.f32.gmra.mxu0 %v123
    %v2438 = vpop.f32.mrf.mxu0
    %v2439 = vadd.f32 %v2419, %v2438
    %2440 = vdwg.mxu0
    %2441 = vmatpush.msra.mxu0 %v668
    %2442 = vmatpush.msra.mxu0 %v667
    %2443 = vmatpush.msra.mxu0 %v666
    %2444 = vmatpush.msra.mxu0 %v665
    %2445 = vmatpush.msra.mxu0 %v664
    %2446 = vmatpush.msra.mxu0 %v663
    %2447 = vmatpush.msra.mxu0 %v662
    %2448 = vmatpush.msra.mxu0 %v661
    %2449 = vmatpush.msra.mxu0 %v660
    %2450 = vmatpush.msra.mxu0 %v659
    %2451 = vmatpush.msra.mxu0 %v658
    %2452 = vmatpush.msra.mxu0 %v657
    %2453 = vmatpush.msra.mxu0 %v656
    %2454 = vmatpush.msra.mxu0 %v655
    %2455 = vmatpush.msra.mxu0 %v654
    %2456 = vmatpush.msra.mxu0 %v653
    %2457 = vmatmul.f32.gmra.mxu0 %v124
    %v2458 = vpop.f32.mrf.mxu0
    %v2459 = vadd.f32 %v2439, %v2458
    %2460 = vdwg.mxu0
    %v2461 = vld [vmem:[#allocation10] sm:$0x1]
    %v2462 = vperm.slane %v2461, 0
    %v2463 = vadd.f32 %v2459, %v2462
    %v2464 = vxor.u32 %v2463, 2147483648
    %v2465 = vmul.f32 %v2464, 1.442695
    %v2466 = vpow.pop %v2465
    %v2467 = vadd.f32 %v2466, 1.0
    %v2468 = vrcp.pop %v2467
    %v2469 = vmul.f32 %v2467, %v2468
    %v2470 = vsub.f32 1.0, %v2469
    %v2471 = vmul.f32 %v2468, %v2470
    %v2472 = vadd.f32 %v2468, %v2471
    %vm2473 = vweird.f32 %v2467
    %vm2474 = vweird.f32 %v2468
    %vm2475 = vmor %vm2473, %vm2474
    %v2476 = vsel %vm2475, %v2468, %v2472
    %v2477 = vand.u32 2147483647, %v2467
    %vm2478 = vcmp.eq.f32.partialorder %v2477, 8.507059e+37
    %v2479 = vand.u32 %v2467, 2147483648
    %v2480 = vor.u32 1.1754944e-38, %v2479
    %v2481 = vsel %vm2478, %v2480, %v2476
    %v2482 = vmul.f32 1.0, %v2481
    %2483 = vst [vmem:[#allocation11] sm:$0xff] %v2482
    // Predicated region
    $region42: #{tpu_custom_call.1} parent=1 // pred_check
      _
    $region43: #{tpu_custom_call.1} parent=1 // pred_check_branch
      %2485 = sbr.rel (0) target = $region45
    $region44: #{tpu_custom_call.1} parent=1 // pred_region
      %2487 = vsyncadd [#allocation4], 0
      %s2489 = sshll.u32 [#allocation11], 4
      %s2490 = int_to_ptr.vmem [resolvable:$true] %s2489
      %s2491 = sshll.u32 %s5, 4
      %s2492 = int_to_ptr.hbm [resolvable:$true] %s2491
      %2494 = dma.vmem_to_hbm [thread:$0]  %s2490, 128, %s2492, [#allocation4]
    $region45: #{tpu_custom_call.1} parent=1 // pred_fallthru
      _
    // Predicated region
    $region46: #{tpu_custom_call.1} parent=1 // pred_check
      _
    $region47: #{tpu_custom_call.1} parent=1 // pred_check_branch
      %2496 = sbr.rel (0) target = $region49
    $region48: #{tpu_custom_call.1} parent=1 // pred_region
      %2498 = dma.done [#allocation4], 128
    $region49: #{tpu_custom_call.1} parent=1 // pred_fallthru
      _
    %2499 = vsyncpa [#allocation3], 1
    %2500 = vsyncpa [#allocation6], 1
    %2501 = vsyncpa [#allocation9], 1
    %2502 = vsyncpa [#allocation4], 1

</llo_original>
